<compile_context>
chip_gen: v6e
topology: v6e:2x2x1
jax: 0.10.0
libtpu: 0.0.40
codegen_flags: <defaults>
</compile_context>

<pallas_src>
import functools

import jax
import jax.numpy as jnp
from jax.experimental import pallas as pl
from jax.experimental.pallas import tpu as pltpu


# ---------------------------------------------------------------------------
# VMEM sizing / tiling helpers (per-generation)
# ---------------------------------------------------------------------------

def _vmem_capacity_bytes():
    try:
        return int(pltpu.get_tpu_info().vmem_capacity_bytes)
    except Exception:
        return 64 << 20          # conservative default (v7x per-TensorCore)


def _pad(x, m):
    return ((x + m - 1) // m) * m


def _falayer_vmem_bytes(tm, n, h):
    lane_h = _pad(h, 128)
    lane_n = _pad(n, 128)
    adj = 2 * tm * lane_n * 2                               # bf16 adj tile, 2 bufs
    rowblk = 2 * (2 * tm * lane_h * 4 + tm * 128 * 4)       # h0 + out f32, gi col
    resident = 2 * (8 * lane_n * 4 + _pad(n, 16) * lane_h * 2)  # gj row + bf16 h
    inter = tm * lane_n * (4 + 2)                           # fused f32 tanh temp + bf16 e
    return adj + rowblk + resident + inter + (4 << 20)


def _choose_block_rows(n, h, requested):
    tm = min(requested, n)
    assert n % tm == 0, "block_rows must divide the node count"
    budget = int(_vmem_capacity_bytes() * 0.65)
    while tm > 8 and _falayer_vmem_bytes(tm, n, h) > budget:
        tm //= 2
    return tm


def _falayer_vmem_limit(tm, n, h):
    cap = _vmem_capacity_bytes()
    need = _falayer_vmem_bytes(tm, n, h)
    return int(min(max(need, 32 << 20), max(cap - (8 << 20), 32 << 20)))


# ---------------------------------------------------------------------------
# Kernels
# ---------------------------------------------------------------------------

def _mlp_kernel(x_ref, w_ref, b_ref, h_ref):
    # MLP: Dropout -> Linear(features, hidden) -> ReLU -> Dropout
    # TODO(synk): dropout is treated as eval-mode identity (no RNG masking).
    h = jnp.dot(x_ref[...].astype(jnp.bfloat16),
                w_ref[...].astype(jnp.bfloat16),
                preferred_element_type=jnp.float32)
    h_ref[...] = jnp.maximum(h + b_ref[...], 0.0)


def _falayer_kernel(eps, h0_ref, adjn_ref, gi_ref, gj_ref, hbf_ref, out_ref):
    # One FALayer (+ eps * h0 residual) for one block of destination rows.
    #   h0_ref   : [TM, H] f32   row block of the post-MLP features
    #   adjn_ref : [TM, N] bf16  row block of d_i*d_j*adj (precomputed)
    #   gi_ref   : [TM, 1] f32   gate_i + bias for this row block
    #   gj_ref   : [1,  N] f32   gate_j over all source nodes (resident)
    #   hbf_ref  : [N,  H] bf16  current features (resident)
    # e is produced directly in bf16 (one fused expression feeding the MXU);
    # tanh/elementwise math stays f32 (works on all of v5e/v6e/v7x).
    e = (jnp.tanh(gi_ref[...] + gj_ref[...]) * adjn_ref[...]).astype(jnp.bfloat16)
    agg = jnp.dot(e, hbf_ref[...], preferred_element_type=jnp.float32)   # [TM, H]
    out_ref[...] = eps * h0_ref[...] + agg


def _final_kernel(h_ref, w_ref, b_ref, out_ref):
    # last Linear(hidden, classes) + row-wise log_softmax
    logits = jnp.dot(h_ref[...], w_ref[...],
                     preferred_element_type=jnp.float32) + b_ref[...]
    m = jnp.max(logits, axis=1, keepdims=True)
    lse = m + jnp.log(jnp.sum(jnp.exp(logits - m), axis=1, keepdims=True))
    out_ref[...] = logits - lse


# ---------------------------------------------------------------------------
# pallas_call wrappers
# ---------------------------------------------------------------------------

def mlp_forward(x, w, b, *, block_rows):
    N, F = x.shape
    H = w.shape[1]
    tm = min(block_rows, N)
    assert N % tm == 0
    return pl.pallas_call(
        _mlp_kernel,
        out_shape=jax.ShapeDtypeStruct((N, H), jnp.float32),
        grid=(N // tm,),
        in_specs=[pl.BlockSpec((tm, F), lambda i: (i, 0)),
                  pl.BlockSpec((F, H), lambda i: (0, 0)),
                  pl.BlockSpec((1, H), lambda i: (0, 0))],
        out_specs=pl.BlockSpec((tm, H), lambda i: (i, 0)),
        compiler_params=pltpu.CompilerParams(
            dimension_semantics=("parallel",)),
    )(x, w, b)


def falayer_forward(h0, adj_norm, gi, gj_row, h_bf, *, eps, block_rows):
    N, H = h0.shape
    tm = _choose_block_rows(N, H, block_rows)
    kernel = functools.partial(_falayer_kernel, eps)
    return pl.pallas_call(
        kernel,
        out_shape=jax.ShapeDtypeStruct((N, H), jnp.float32),
        grid=(N // tm,),
        in_specs=[pl.BlockSpec((tm, H), lambda i: (i, 0)),   # h0 row block (f32)
                  pl.BlockSpec((tm, N), lambda i: (i, 0)),   # adj_norm row block (bf16)
                  pl.BlockSpec((tm, 1), lambda i: (i, 0)),   # gate_i + bias (f32)
                  pl.BlockSpec((1, N), lambda i: (0, 0)),    # gate_j row (resident)
                  pl.BlockSpec((N, H), lambda i: (0, 0))],   # h in bf16 (resident)
        out_specs=pl.BlockSpec((tm, H), lambda i: (i, 0)),
        compiler_params=pltpu.CompilerParams(
            dimension_semantics=("parallel",),
            vmem_limit_bytes=_falayer_vmem_limit(tm, N, H)),
    )(h0, adj_norm, gi, gj_row, h_bf)


def final_forward(h, w, b, *, block_rows):
    N, H = h.shape
    C = w.shape[1]
    tm = min(block_rows, N)
    assert N % tm == 0
    return pl.pallas_call(
        _final_kernel,
        out_shape=jax.ShapeDtypeStruct((N, C), jnp.float32),
        grid=(N // tm,),
        in_specs=[pl.BlockSpec((tm, H), lambda i: (i, 0)),
                  pl.BlockSpec((H, C), lambda i: (0, 0)),
                  pl.BlockSpec((1, C), lambda i: (0, 0))],
        out_specs=pl.BlockSpec((tm, C), lambda i: (i, 0)),
        compiler_params=pltpu.CompilerParams(
            dimension_semantics=("parallel",)),
    )(h, w, b)


def fagcn_forward(x, adj, deg, params, *, eps, layer_num, block_rows=512):
    H = params["w_mlp"].shape[1]
    h = mlp_forward(x, params["w_mlp"], params["b_mlp"], block_rows=block_rows)
    h0 = h

    # Symmetric degree normalization folded into the adjacency once, stored
    # bf16 — reused by every layer and every grid step, halves the dominant
    # HBM stream, removes per-step deg math from the kernel.
    adj_norm = ((deg * deg.T) * adj).astype(jnp.bfloat16)          # [N, N]

    for l in range(layer_num):
        wg = params["wg"][l]                                        # [2H, 1]
        wg2 = jnp.concatenate([wg[:H], wg[H:]], axis=1)             # [H, 2]
        # Grid-invariant gate work hoisted out of the kernel: one [N,H]x[H,2]
        # matmul per layer instead of two 1-lane matmuls per grid step.
        g = jnp.dot(h, wg2)                                         # [N, 2]
        gi = g[:, 0:1] + params["bg"][l]                            # [N, 1]
        gj_row = g[:, 1:2].T                                        # [1, N]
        h_bf = h.astype(jnp.bfloat16)                               # [N, H]
        h = falayer_forward(h0, adj_norm, gi, gj_row, h_bf,
                            eps=eps, block_rows=block_rows)

    return final_forward(h, params["w_last"], params["b_last"],
                         block_rows=block_rows)


# ---------------------------------------------------------------------------
# Pure-JAX reference (f32, original dense formulation)
# ---------------------------------------------------------------------------

def fagcn_ref(x, adj, deg, params, *, eps, layer_num):
    h = jnp.maximum(x @ params["w_mlp"] + params["b_mlp"], 0.0)
    h0 = h
    dd = deg * deg.T
    H = h.shape[1]
    for l in range(layer_num):
        wg = params["wg"][l]
        bg = params["bg"][l]
        gi = h @ wg[:H, :]
        gj = h @ wg[H:, :]
        e = jnp.tanh(gi + gj.T + bg) * adj * dd
        h = eps * h0 + e @ h
    logits = h @ params["w_last"] + params["b_last"]
    return jax.nn.log_softmax(logits, axis=1)


# ---------------------------------------------------------------------------
# Demo / self-check
# ---------------------------------------------------------------------------

if __name__ == "__main__":
    N, F, H, C = 128, 16, 32, 8        # nodes, features, hidden, classes
    LAYER_NUM = 2
    EPS = 0.3
    BLOCK_ROWS = 64                    # exercises a 2-step row-block grid

    key = jax.random.PRNGKey(0)
    k_x, k_adj, k_mlp, k_bmlp, k_g, k_bg, k_last, k_blast = jax.random.split(key, 8)

    # Node features.
    x = jax.random.normal(k_x, (N, F), dtype=jnp.float32)

    # Random symmetric binary adjacency (no self-loops).
    a = (jax.random.uniform(k_adj, (N, N)) < 0.05).astype(jnp.float32)
    adj = jnp.maximum(a, a.T) * (1.0 - jnp.eye(N, dtype=jnp.float32))
    degree = jnp.sum(adj, axis=1, keepdims=True)              # [N, 1]
    deg = 1.0 / jnp.sqrt(jnp.maximum(degree, 1.0))            # d_i = degree^{-1/2}

    # Deterministically initialized parameters (synthetic, no checkpoint).
    params = {
        "w_mlp":  0.1 * jax.random.normal(k_mlp,  (F, H), dtype=jnp.float32),
        "b_mlp":  0.1 * jax.random.normal(k_bmlp, (1, H), dtype=jnp.float32),
        "wg":     0.1 * jax.random.normal(k_g,    (LAYER_NUM, 2 * H, 1), dtype=jnp.float32),
        "bg":     0.1 * jax.random.normal(k_bg,   (LAYER_NUM, 1, 1), dtype=jnp.float32),
        "w_last": 0.1 * jax.random.normal(k_last, (H, C), dtype=jnp.float32),
        "b_last": 0.1 * jax.random.normal(k_blast, (1, C), dtype=jnp.float32),
    }

    fwd = jax.jit(functools.partial(fagcn_forward, eps=EPS, layer_num=LAYER_NUM,
                                    block_rows=BLOCK_ROWS))
    out = jax.block_until_ready(fwd(x, adj, deg, params))

    ref = fagcn_ref(x, adj, deg, params, eps=EPS, layer_num=LAYER_NUM)
    assert out.shape == (N, C)
    # Tolerance relaxed vs a pure-f32 reference because the normalized
    # adjacency, e, and h operands of the MXU matmuls are bf16 (f32 accum).
    assert jnp.allclose(out, ref, rtol=2e-2, atol=2e-2), \
        "Pallas output mismatch vs JAX reference"

    print("KERNEL_OK")
</pallas_src>

<mosaic_0001>
module attributes {stable_mosaic.version = 11 : i64} {
  func.func @_mlp_kernel(%arg0: i32, %arg1: memref<64x16xf32, #tpu.memory_space<vmem>>, %arg2: memref<16x32xf32, #tpu.memory_space<vmem>>, %arg3: memref<1x32xf32, #tpu.memory_space<vmem>>, %arg4: memref<64x32xf32, #tpu.memory_space<vmem>>) attributes {dimension_semantics = [#tpu.dimension_semantics<parallel>], iteration_bounds = array<i64: 2>, scalar_prefetch = 0 : i64, scratch_operands = 0 : i64, tpu.core_type = #tpu.core_type<tc>, window_params = [{transform_indices = @transform_0, window_bounds = array<i64: 64, 16>}, {pipeline_mode = #tpu.pipeline_mode<synchronous>, transform_indices = @transform_1, window_bounds = array<i64: 16, 32>}, {pipeline_mode = #tpu.pipeline_mode<synchronous>, transform_indices = @transform_2, window_bounds = array<i64: 1, 32>}, {transform_indices = @transform_3, window_bounds = array<i64: 64, 32>}]} {
    %c0 = arith.constant 0 : index
    %c0_0 = arith.constant 0 : index
    %0 = vector.load %arg1[%c0, %c0_0] : memref<64x16xf32, #tpu.memory_space<vmem>>, vector<64x16xf32>
    %1 = arith.truncf %0 : vector<64x16xf32> to vector<64x16xbf16>
    %c0_1 = arith.constant 0 : index
    %c0_2 = arith.constant 0 : index
    %2 = vector.load %arg2[%c0_1, %c0_2] : memref<16x32xf32, #tpu.memory_space<vmem>>, vector<16x32xf32>
    %3 = arith.truncf %2 : vector<16x32xf32> to vector<16x32xbf16>
    %cst = arith.constant dense<0.000000e+00> : vector<64x32xf32>
    %4 = tpu.matmul %1, %3, %cst {dimension_numbers = #tpu.dot_dimension_numbers<[1], [0], [0], [1], [0, 0, 1, 1], [], []>} : vector<64x16xbf16>, vector<16x32xbf16>, vector<64x32xf32> -> vector<64x32xf32>
    %c0_3 = arith.constant 0 : index
    %c0_4 = arith.constant 0 : index
    %5 = vector.load %arg3[%c0_3, %c0_4] : memref<1x32xf32, #tpu.memory_space<vmem>>, vector<1x32xf32>
    %6 = vector.broadcast %5 : vector<1x32xf32> to vector<64x32xf32>
    %7 = arith.addf %4, %6 : vector<64x32xf32>
    %cst_5 = arith.constant 0.000000e+00 : f32
    %8 = vector.broadcast %cst_5 : f32 to vector<64x32xf32>
    %9 = arith.maximumf %7, %8 : vector<64x32xf32>
    %c0_6 = arith.constant 0 : index
    %c0_7 = arith.constant 0 : index
    %10 = vector.load %arg4[%c0_6, %c0_7] : memref<64x32xf32, #tpu.memory_space<vmem>>, vector<64x32xf32>
    tpu.vector_store %arg4[%c0_6, %c0_7], %9 {strides = array<i32>} : memref<64x32xf32, #tpu.memory_space<vmem>>, vector<64x32xf32>,
    return
  }
  func.func @transform_0(%arg0: i32) -> (i32, i32) {
    %c0_i32 = arith.constant 0 : i32
    %c0_i32_0 = arith.constant 0 : i32
    return %arg0, %c0_i32 : i32, i32
  }
  func.func @transform_1(%arg0: i32) -> (i32, i32) {
    %c0_i32 = arith.constant 0 : i32
    %c0_i32_0 = arith.constant 0 : i32
    %c0_i32_1 = arith.constant 0 : i32
    return %c0_i32, %c0_i32_0 : i32, i32
  }
  func.func @transform_2(%arg0: i32) -> (i32, i32) {
    %c0_i32 = arith.constant 0 : i32
    %c0_i32_0 = arith.constant 0 : i32
    %c0_i32_1 = arith.constant 0 : i32
    return %c0_i32, %c0_i32_0 : i32, i32
  }
  func.func @transform_3(%arg0: i32) -> (i32, i32) {
    %c0_i32 = arith.constant 0 : i32
    %c0_i32_0 = arith.constant 0 : i32
    return %arg0, %c0_i32 : i32, i32
  }
}

module attributes {stable_mosaic.version = 11 : i64} {
  func.func @_falayer_kernel(%arg0: i32, %arg1: memref<64x32xf32, #tpu.memory_space<vmem>>, %arg2: memref<64x128xbf16, #tpu.memory_space<vmem>>, %arg3: memref<64x1xf32, #tpu.memory_space<vmem>>, %arg4: memref<1x128xf32, #tpu.memory_space<vmem>>, %arg5: memref<128x32xbf16, #tpu.memory_space<vmem>>, %arg6: memref<64x32xf32, #tpu.memory_space<vmem>>) attributes {dimension_semantics = [#tpu.dimension_semantics<parallel>], iteration_bounds = array<i64: 2>, scalar_prefetch = 0 : i64, scratch_operands = 0 : i64, tpu.core_type = #tpu.core_type<tc>, window_params = [{transform_indices = @transform_0, window_bounds = array<i64: 64, 32>}, {transform_indices = @transform_1, window_bounds = array<i64: 64, 128>}, {transform_indices = @transform_2, window_bounds = array<i64: 64, 1>}, {pipeline_mode = #tpu.pipeline_mode<synchronous>, transform_indices = @transform_3, window_bounds = array<i64: 1, 128>}, {pipeline_mode = #tpu.pipeline_mode<synchronous>, transform_indices = @transform_4, window_bounds = array<i64: 128, 32>}, {transform_indices = @transform_5, window_bounds = array<i64: 64, 32>}]} {
    %c0 = arith.constant 0 : index
    %c0_0 = arith.constant 0 : index
    %0 = vector.load %arg3[%c0, %c0_0] : memref<64x1xf32, #tpu.memory_space<vmem>>, vector<64x1xf32>
    %c0_1 = arith.constant 0 : index
    %c0_2 = arith.constant 0 : index
    %1 = vector.load %arg4[%c0_1, %c0_2] : memref<1x128xf32, #tpu.memory_space<vmem>>, vector<1x128xf32>
    %2 = vector.broadcast %0 : vector<64x1xf32> to vector<64x128xf32>
    %3 = vector.broadcast %1 : vector<1x128xf32> to vector<64x128xf32>
    %4 = arith.addf %2, %3 : vector<64x128xf32>
    %5 = math.tanh %4 : vector<64x128xf32>
    %c0_3 = arith.constant 0 : index
    %c0_4 = arith.constant 0 : index
    %6 = vector.load %arg2[%c0_3, %c0_4] : memref<64x128xbf16, #tpu.memory_space<vmem>>, vector<64x128xbf16>
    %7 = arith.extf %6 : vector<64x128xbf16> to vector<64x128xf32>
    %8 = arith.mulf %5, %7 : vector<64x128xf32>
    %9 = arith.truncf %8 : vector<64x128xf32> to vector<64x128xbf16>
    %c0_5 = arith.constant 0 : index
    %c0_6 = arith.constant 0 : index
    %10 = vector.load %arg5[%c0_5, %c0_6] : memref<128x32xbf16, #tpu.memory_space<vmem>>, vector<128x32xbf16>
    %cst = arith.constant dense<0.000000e+00> : vector<64x32xf32>
    %11 = tpu.matmul %9, %10, %cst {dimension_numbers = #tpu.dot_dimension_numbers<[1], [0], [0], [1], [0, 0, 1, 1], [], []>} : vector<64x128xbf16>, vector<128x32xbf16>, vector<64x32xf32> -> vector<64x32xf32>
    %c0_7 = arith.constant 0 : index
    %c0_8 = arith.constant 0 : index
    %12 = vector.load %arg1[%c0_7, %c0_8] : memref<64x32xf32, #tpu.memory_space<vmem>>, vector<64x32xf32>
    %cst_9 = arith.constant 3.000000e-01 : f32
    %13 = vector.broadcast %cst_9 : f32 to vector<64x32xf32>
    %14 = arith.mulf %13, %12 : vector<64x32xf32>
    %15 = arith.addf %14, %11 : vector<64x32xf32>
    %c0_10 = arith.constant 0 : index
    %c0_11 = arith.constant 0 : index
    %16 = vector.load %arg6[%c0_10, %c0_11] : memref<64x32xf32, #tpu.memory_space<vmem>>, vector<64x32xf32>
    tpu.vector_store %arg6[%c0_10, %c0_11], %15 {strides = array<i32>} : memref<64x32xf32, #tpu.memory_space<vmem>>, vector<64x32xf32>,
    return
  }
  func.func @transform_0(%arg0: i32) -> (i32, i32) {
    %c0_i32 = arith.constant 0 : i32
    %c0_i32_0 = arith.constant 0 : i32
    return %arg0, %c0_i32 : i32, i32
  }
  func.func @transform_1(%arg0: i32) -> (i32, i32) {
    %c0_i32 = arith.constant 0 : i32
    %c0_i32_0 = arith.constant 0 : i32
    return %arg0, %c0_i32 : i32, i32
  }
  func.func @transform_2(%arg0: i32) -> (i32, i32) {
    %c0_i32 = arith.constant 0 : i32
    %c0_i32_0 = arith.constant 0 : i32
    return %arg0, %c0_i32 : i32, i32
  }
  func.func @transform_3(%arg0: i32) -> (i32, i32) {
    %c0_i32 = arith.constant 0 : i32
    %c0_i32_0 = arith.constant 0 : i32
    %c0_i32_1 = arith.constant 0 : i32
    return %c0_i32, %c0_i32_0 : i32, i32
  }
  func.func @transform_4(%arg0: i32) -> (i32, i32) {
    %c0_i32 = arith.constant 0 : i32
    %c0_i32_0 = arith.constant 0 : i32
    %c0_i32_1 = arith.constant 0 : i32
    return %c0_i32, %c0_i32_0 : i32, i32
  }
  func.func @transform_5(%arg0: i32) -> (i32, i32) {
    %c0_i32 = arith.constant 0 : i32
    %c0_i32_0 = arith.constant 0 : i32
    return %arg0, %c0_i32 : i32, i32
  }
}

module attributes {stable_mosaic.version = 11 : i64} {
  func.func @_final_kernel(%arg0: i32, %arg1: memref<64x32xf32, #tpu.memory_space<vmem>>, %arg2: memref<32x8xf32, #tpu.memory_space<vmem>>, %arg3: memref<1x8xf32, #tpu.memory_space<vmem>>, %arg4: memref<64x8xf32, #tpu.memory_space<vmem>>) attributes {dimension_semantics = [#tpu.dimension_semantics<parallel>], iteration_bounds = array<i64: 2>, scalar_prefetch = 0 : i64, scratch_operands = 0 : i64, tpu.core_type = #tpu.core_type<tc>, window_params = [{transform_indices = @transform_0, window_bounds = array<i64: 64, 32>}, {pipeline_mode = #tpu.pipeline_mode<synchronous>, transform_indices = @transform_1, window_bounds = array<i64: 32, 8>}, {pipeline_mode = #tpu.pipeline_mode<synchronous>, transform_indices = @transform_2, window_bounds = array<i64: 1, 8>}, {transform_indices = @transform_3, window_bounds = array<i64: 64, 8>}]} {
    %c0 = arith.constant 0 : index
    %c0_0 = arith.constant 0 : index
    %0 = vector.load %arg1[%c0, %c0_0] : memref<64x32xf32, #tpu.memory_space<vmem>>, vector<64x32xf32>
    %c0_1 = arith.constant 0 : index
    %c0_2 = arith.constant 0 : index
    %1 = vector.load %arg2[%c0_1, %c0_2] : memref<32x8xf32, #tpu.memory_space<vmem>>, vector<32x8xf32>
    %cst = arith.constant dense<0.000000e+00> : vector<64x8xf32>
    %2 = tpu.matmul %0, %1, %cst {dimension_numbers = #tpu.dot_dimension_numbers<[1], [0], [0], [1], [0, 0, 1, 1], [], []>} : vector<64x32xf32>, vector<32x8xf32>, vector<64x8xf32> -> vector<64x8xf32>
    %c0_3 = arith.constant 0 : index
    %c0_4 = arith.constant 0 : index
    %3 = vector.load %arg3[%c0_3, %c0_4] : memref<1x8xf32, #tpu.memory_space<vmem>>, vector<1x8xf32>
    %4 = vector.broadcast %3 : vector<1x8xf32> to vector<64x8xf32>
    %5 = arith.addf %2, %4 : vector<64x8xf32>
    %cst_5 = arith.constant dense<0xFF800000> : vector<64xf32>
    %6 = vector.multi_reduction <maximumf>, %5, %cst_5 [1] : vector<64x8xf32> to vector<64xf32>
    %7 = vector.shape_cast %6 : vector<64xf32> to vector<64x1xf32>
    %8 = vector.broadcast %7 : vector<64x1xf32> to vector<64x8xf32>
    %9 = arith.subf %5, %8 : vector<64x8xf32>
    %10 = math.exp %9 : vector<64x8xf32>
    %cst_6 = arith.constant dense<0.000000e+00> : vector<64xf32>
    %11 = vector.multi_reduction <add>, %10, %cst_6 [1] : vector<64x8xf32> to vector<64xf32>
    %12 = vector.shape_cast %11 : vector<64xf32> to vector<64x1xf32>
    %13 = math.log %12 : vector<64x1xf32>
    %14 = arith.addf %7, %13 : vector<64x1xf32>
    %15 = vector.broadcast %14 : vector<64x1xf32> to vector<64x8xf32>
    %16 = arith.subf %5, %15 : vector<64x8xf32>
    %c0_7 = arith.constant 0 : index
    %c0_8 = arith.constant 0 : index
    %17 = vector.load %arg4[%c0_7, %c0_8] : memref<64x8xf32, #tpu.memory_space<vmem>>, vector<64x8xf32>
    tpu.vector_store %arg4[%c0_7, %c0_8], %16 {strides = array<i32>} : memref<64x8xf32, #tpu.memory_space<vmem>>, vector<64x8xf32>,
    return
  }
  func.func @transform_0(%arg0: i32) -> (i32, i32) {
    %c0_i32 = arith.constant 0 : i32
    %c0_i32_0 = arith.constant 0 : i32
    return %arg0, %c0_i32 : i32, i32
  }
  func.func @transform_1(%arg0: i32) -> (i32, i32) {
    %c0_i32 = arith.constant 0 : i32
    %c0_i32_0 = arith.constant 0 : i32
    %c0_i32_1 = arith.constant 0 : i32
    return %c0_i32, %c0_i32_0 : i32, i32
  }
  func.func @transform_2(%arg0: i32) -> (i32, i32) {
    %c0_i32 = arith.constant 0 : i32
    %c0_i32_0 = arith.constant 0 : i32
    %c0_i32_1 = arith.constant 0 : i32
    return %c0_i32, %c0_i32_0 : i32, i32
  }
  func.func @transform_3(%arg0: i32) -> (i32, i32) {
    %c0_i32 = arith.constant 0 : i32
    %c0_i32_0 = arith.constant 0 : i32
    return %arg0, %c0_i32 : i32, i32
  }
}

</mosaic_0001>

<llo_original>
// kernel: fagcn_forward.4
$region0: #{fagcn_forward.4}
  #allocation0 [shape = 'u32[]', space=smem, size = 0x4, offset = 0x4, fixed_abs, tag = 'smem constant byte address 0x4 - core index']
  #allocation1 [shape = 'u32[144,128]{1,0:T(1,128)}', space=vmem, size = 0x12000, scoped, tag = 'internal scratch']
  %s0 = inlined_call_operand.vmem [shape: f32[128,16], index: 0, kind: input, shape index: {}]
  %s1 = inlined_call_operand.vmem [shape: f32[16,32], index: 1, kind: input, shape index: {}]
  %s2 = inlined_call_operand.vmem [shape: f32[1,32], index: 2, kind: input, shape index: {}]
  %s3 = inlined_call_operand.vmem [shape: f32[128,32], index: 3, kind: output, shape index: {}]
  %s4 = sld [smem:[#allocation0]]
  $region45: #{fagcn_forward.4} parent=0
    _
  %s6 = ssub.s32 1, %s4
  %s7 = scalar_select 0, %s6, %s4
  loop: start=0, step=1, limit=4
  $region2: #{fagcn_forward.4} parent=0 // loop_pre_header
    _
  $region3: #{fagcn_forward.4} parent=0 // loop_header
    %s9 = sphi 0, %s13
    %p10 = scmp.ge.s32.totalorder %s9, 4
    %s19 = sphi 0, %s21
    %s22 = sphi 0, %s19
    %s23 = sphi 0, %s22
    %s39 = sphi 0, %s23
    %s43 = sphi 0, %s43
    %s45 = sphi 0, %s43
    %s46 = sphi 0, %s45
    %s60 = sphi 0, %s46
    %s64 = sphi 0, %s64
    %s66 = sphi 0, %s64
    %s67 = sphi 0, %s66
    %s81 = sphi 0, %s67
    %s87 = sphi 0, %s89
    %s90 = sphi 0, %s87
    %s91 = sphi 0, %s90
    %s107 = sphi 0, %s91
  $region4: #{fagcn_forward.4} parent=0 // loop_header_branch
    %12 = sbr.rel (%p10) target = $region8
  $region5: #{fagcn_forward.4} parent=0 // loop_body
    %s14 = ssub.s32 %s9, 1
    %s15 = ssub.s32 %s9, 2
    %s16 = sadd.s32 %s9, 1
    %s17 = ssub.s32 %s9, %s16
    %p18 = scmp.eq.s32.totalorder %s17, 0
    %s20 = sadd.s32 %s19, 1
    %s21 = scalar_select %p18, %s19, %s20
    %p24 = pneg %p18
    %p25 = scmp.eq.s32.totalorder %s9, 1
    %p26 = por %p24, %p25
    %p27 = scmp.ne.s32.totalorder %s19, %s22
    %p28 = scmp.eq.s32.totalorder %s9, 0
    %p29 = por %p27, %p28
    %p30 = scmp.ne.s32.totalorder %s19, %s22
    %p31 = scmp.eq.s32.totalorder %s14, 1
    %p32 = por %p30, %p31
    %p33 = scmp.ne.s32.totalorder %s22, %s23
    %p34 = scmp.eq.s32.totalorder %s14, 0
    %p35 = por %p33, %p34
    %p36 = scmp.ne.s32.totalorder %s22, %s23
    %p37 = scmp.eq.s32.totalorder %s15, 1
    %p38 = por %p36, %p37
    %p40 = scmp.ne.s32.totalorder %s23, %s39
    %p41 = scmp.eq.s32.totalorder %s15, 0
    %p42 = por %p40, %p41
    %s44 = sadd.s32 %s43, 1
    %p47 = scmp.eq.s32.totalorder %s9, 1
    %p48 = scmp.ne.s32.totalorder %s43, %s45
    %p49 = scmp.eq.s32.totalorder %s9, 0
    %p50 = por %p48, %p49
    %p51 = scmp.ne.s32.totalorder %s43, %s45
    %p52 = scmp.eq.s32.totalorder %s14, 1
    %p53 = por %p51, %p52
    %p54 = scmp.ne.s32.totalorder %s45, %s46
    %p55 = scmp.eq.s32.totalorder %s14, 0
    %p56 = por %p54, %p55
    %p57 = scmp.ne.s32.totalorder %s45, %s46
    %p58 = scmp.eq.s32.totalorder %s15, 1
    %p59 = por %p57, %p58
    %p61 = scmp.ne.s32.totalorder %s46, %s60
    %p62 = scmp.eq.s32.totalorder %s15, 0
    %p63 = por %p61, %p62
    %s65 = sadd.s32 %s64, 1
    %p68 = scmp.eq.s32.totalorder %s9, 1
    %p69 = scmp.ne.s32.totalorder %s64, %s66
    %p70 = scmp.eq.s32.totalorder %s9, 0
    %p71 = por %p69, %p70
    %p72 = scmp.ne.s32.totalorder %s64, %s66
    %p73 = scmp.eq.s32.totalorder %s14, 1
    %p74 = por %p72, %p73
    %p75 = scmp.ne.s32.totalorder %s66, %s67
    %p76 = scmp.eq.s32.totalorder %s14, 0
    %p77 = por %p75, %p76
    %p78 = scmp.ne.s32.totalorder %s66, %s67
    %p79 = scmp.eq.s32.totalorder %s15, 1
    %p80 = por %p78, %p79
    %p82 = scmp.ne.s32.totalorder %s67, %s81
    %p83 = scmp.eq.s32.totalorder %s15, 0
    %p84 = por %p82, %p83
    %s85 = ssub.s32 %s9, %s16
    %p86 = scmp.eq.s32.totalorder %s85, 0
    %s88 = sadd.s32 %s87, 1
    %s89 = scalar_select %p86, %s87, %s88
    %p92 = pneg %p86
    %p93 = scmp.eq.s32.totalorder %s9, 1
    %p94 = por %p92, %p93
    %p95 = scmp.ne.s32.totalorder %s87, %s90
    %p96 = scmp.eq.s32.totalorder %s9, 0
    %p97 = por %p95, %p96
    %p98 = scmp.ne.s32.totalorder %s87, %s90
    %p99 = scmp.eq.s32.totalorder %s14, 1
    %p100 = por %p98, %p99
    %p101 = scmp.ne.s32.totalorder %s90, %s91
    %p102 = scmp.eq.s32.totalorder %s14, 0
    %p103 = por %p101, %p102
    %p104 = scmp.ne.s32.totalorder %s90, %s91
    %p105 = scmp.eq.s32.totalorder %s15, 1
    %p106 = por %p104, %p105
    %p108 = scmp.ne.s32.totalorder %s91, %s107
    %p109 = scmp.eq.s32.totalorder %s15, 0
    %p110 = por %p108, %p109
    %p111 = scmp.le.s32.totalorder 1, %s9
    %p112 = scmp.lt.s32.totalorder %s9, 3
    %p113 = pnand %p111, %p112
    %p114 = pneg %p113
    // Predicated region
    $region9: #{fagcn_forward.4} parent=5 // pred_check
      _
    $region10: #{fagcn_forward.4} parent=5 // pred_check_branch
      %116 = sbr.rel (%p113) target = $region12
    $region11: #{fagcn_forward.4} parent=5 // pred_region
      %s117 = ssub.s32 %s9, 1
      // Predicated region
      $region13: #{fagcn_forward.4} parent=11 // pred_check
        %p118 = pneg %p56
      $region14: #{fagcn_forward.4} parent=11 // pred_check_branch
        %120 = sbr.rel (%p118) target = $region16
      $region15: #{fagcn_forward.4} parent=11 // pred_region
        _
      $region16: #{fagcn_forward.4} parent=11 // pred_fallthru
        _
      // Predicated region
      $region17: #{fagcn_forward.4} parent=11 // pred_check
        %p121 = pneg %p77
      $region18: #{fagcn_forward.4} parent=11 // pred_check_branch
        %123 = sbr.rel (%p121) target = $region20
      $region19: #{fagcn_forward.4} parent=11 // pred_region
        _
      $region20: #{fagcn_forward.4} parent=11 // pred_fallthru
        _
    $region12: #{fagcn_forward.4} parent=5 // pred_fallthru
      _
    %p124 = scmp.lt.s32.totalorder %s9, 2
    // Predicated region
    $region21: #{fagcn_forward.4} parent=5 // pred_check
      %p125 = pneg %p124
    $region22: #{fagcn_forward.4} parent=5 // pred_check_branch
      %127 = sbr.rel (%p125) target = $region24
    $region23: #{fagcn_forward.4} parent=5 // pred_region
      // Predicated region
      $region25: #{fagcn_forward.4} parent=23 // pred_check
        %p128 = pneg %p29
      $region26: #{fagcn_forward.4} parent=23 // pred_check_branch
        %130 = sbr.rel (%p128) target = $region28
      $region27: #{fagcn_forward.4} parent=23 // pred_region
        %s131 = smul.u32 8, %s9
        %p132 = scmp.lt.s32.totalorder %s131, 15
        %s133 = scalar_select %p132, %s131, 15
        %s134 = smul.addr %s133, 8
        %s135 = scalar_lea.vmem %s0, %s134
        %s136 = smul.u32 8, %s9
      $region28: #{fagcn_forward.4} parent=23 // pred_fallthru
        _
    $region24: #{fagcn_forward.4} parent=5 // pred_fallthru
      _
    %p137 = scmp.le.s32.totalorder 1, %s9
    %p138 = scmp.lt.s32.totalorder %s9, 3
    %p139 = pnand %p137, %p138
    %p140 = pneg %p139
    // Predicated region
    $region29: #{fagcn_forward.4} parent=5 // pred_check
      _
    $region30: #{fagcn_forward.4} parent=5 // pred_check_branch
      %142 = sbr.rel (%p139) target = $region32
    $region31: #{fagcn_forward.4} parent=5 // pred_region
      %s143 = ssub.s32 %s9, 1
      %s144 = smul.u32 8, %s14
      %p145 = scmp.lt.s32.totalorder %s144, 15
      %s146 = scalar_select %p145, %s144, 15
      %s147 = smul.addr %s146, 8
      %s148 = scalar_lea.vmem %s0, %s147
      %p149 = pneg %p35
      %p150 = pneg %p32
      %p151 = pneg %p56
      %p152 = pneg %p53
      %p153 = pneg %p77
      %p154 = pneg %p74
      %p155 = pneg %p103
      %p156 = pneg %p100
      %s157 = smul.u32 8, %s14
      %p158 = scmp.lt.s32.totalorder %s157, 15
      %s159 = scalar_select %p158, %s157, 15
      %s160 = smul.addr %s159, 8
      %s161 = scalar_lea.vmem %s3, %s160
      %s162 = smul.u32 8, %s14
      %p163 = scmp.lt.s32.totalorder %s162, 15
      %s164 = scalar_select %p163, %s162, 15
      %s165 = smul.addr %s164, 8
      %s166 = scalar_lea.vmem %s0, %s165
      %s167 = smul.u32 8, %s14
      %s168 = smul.u32 8, %s14
      %p169 = scmp.lt.s32.totalorder %s168, 15
      %s170 = scalar_select %p169, %s168, 15
      %s171 = smul.addr %s170, 8
      %s172 = scalar_lea.vmem %s3, %s171
      %s173 = smul.u32 8, %s14
      %v175 = vld [vmem:[%s166] sm:$0xff]
      %v176 = vld [vmem:[%s166 + $0x8] sm:$0xff]
      %v177 = vld [vmem:[%s166 + $0x10] sm:$0xff]
      %v178 = vld [vmem:[%s166 + $0x18] sm:$0xff]
      %v179 = vld [vmem:[%s166 + $0x20] sm:$0xff]
      %v180 = vld [vmem:[%s166 + $0x28] sm:$0xff]
      %v181 = vld [vmem:[%s166 + $0x30] sm:$0xff]
      %v182 = vld [vmem:[%s166 + $0x38] sm:$0xff]
      %v183 = vpack.c.bf16 %v176, %v175
      %v184 = vpack.c.bf16 %v178, %v177
      %v185 = vpack.c.bf16 %v180, %v179
      %v186 = vpack.c.bf16 %v182, %v181
      %v187 = vld [vmem:[%s1] sm:$0xff]
      %v188 = vld [vmem:[%s1 + $0x8] sm:$0xff]
      %v189 = vpack.c.bf16 %v188, %v187
      %v190 = vld [vmem:[%s2] sm:$0x1]
      %v192 = vlaneseq
      %v193 = vshrl.u32 %v192, 7
      %v194 = vsub.s32 0, %v193
      %v195 = vrot.slane %v190, %v194
      %vm197 = vcmask 130048
      %v199 = vsel %vm197, %v183, 0
      %v202 = vsel %vm197, %v184, 0
      %v205 = vsel %vm197, %v185, 0
      %v208 = vsel %vm197, %v186, 0
      %210 = vmatprep.subr.bf16.mxu0 0
      %211 = vmatpush1.bf16.msra.mxu0 0
      %212 = vmatprep.subr.bf16.mxu0 0
      %213 = vmatpush1.bf16.msra.mxu0 0
      %214 = vmatprep.subr.bf16.mxu0 0
      %215 = vmatpush1.bf16.msra.mxu0 0
      %216 = vmatprep.subr.bf16.mxu0 0
      %217 = vmatpush1.bf16.msra.mxu0 0
      %218 = vmatprep.subr.bf16.mxu0 0
      %219 = vmatpush1.bf16.msra.mxu0 0
      %220 = vmatprep.subr.bf16.mxu0 0
      %221 = vmatpush1.bf16.msra.mxu0 0
      %222 = vmatprep.subr.bf16.mxu0 0
      %223 = vmatpush1.bf16.msra.mxu0 0
      %224 = vmatprep.subr.bf16.mxu0 0
      %225 = vmatpush1.bf16.msra.mxu0 %v189
      %226 = vmatprep.subr.bf16.mxu0 0
      %227 = vmatpush2.bf16.msra.mxu0 0
      %228 = vmatprep.subr.bf16.mxu0 0
      %229 = vmatpush2.bf16.msra.mxu0 0
      %230 = vmatprep.subr.bf16.mxu0 0
      %231 = vmatpush2.bf16.msra.mxu0 0
      %232 = vmatprep.subr.bf16.mxu0 0
      %233 = vmatpush2.bf16.msra.mxu0 0
      %234 = vmatprep.subr.bf16.mxu0 0
      %235 = vmatpush2.bf16.msra.mxu0 0
      %236 = vmatprep.subr.bf16.mxu0 0
      %237 = vmatpush2.bf16.msra.mxu0 0
      %238 = vmatprep.subr.bf16.mxu0 0
      %239 = vmatpush2.bf16.msra.mxu0 0
      %240 = vmatprep.subr.bf16.mxu0 0
      %241 = vmatpush2.bf16.msra.mxu0 0
      %242 = vmatprep.mubr.bf16.mxu0 0
      %243 = vmatmul.mubr.bf16.gmra.mxu0 %v199
      %v244 = vpop.f32.mrf.mxu0
      %v245 = vadd.f32 %v195, %v244
      %v246 = vpop.f32.mrf.mxu0
      %v247 = vpop.f32.mrf.mxu0
      %v248 = vadd.f32 %v195, %v247
      %v249 = vpop.f32.mrf.mxu0
      %250 = vmatprep.mubr.bf16.mxu0 0
      %251 = vmatmul.mubr.bf16.gmra.mxu0 %v202
      %v252 = vpop.f32.mrf.mxu0
      %v253 = vadd.f32 %v195, %v252
      %v254 = vpop.f32.mrf.mxu0
      %v255 = vpop.f32.mrf.mxu0
      %v256 = vadd.f32 %v195, %v255
      %v257 = vpop.f32.mrf.mxu0
      %258 = vmatprep.mubr.bf16.mxu0 0
      %259 = vmatmul.mubr.bf16.gmra.mxu0 %v205
      %v260 = vpop.f32.mrf.mxu0
      %v261 = vadd.f32 %v195, %v260
      %v262 = vpop.f32.mrf.mxu0
      %v263 = vpop.f32.mrf.mxu0
      %v264 = vadd.f32 %v195, %v263
      %v265 = vpop.f32.mrf.mxu0
      %266 = vmatprep.mubr.bf16.mxu0 0
      %267 = vmatmul.mubr.bf16.gmra.mxu0 %v208
      %v268 = vpop.f32.mrf.mxu0
      %v269 = vadd.f32 %v195, %v268
      %v270 = vpop.f32.mrf.mxu0
      %v271 = vpop.f32.mrf.mxu0
      %v272 = vadd.f32 %v195, %v271
      %v273 = vpop.f32.mrf.mxu0
      %274 = vdwg.mxu0
      %v275 = vmax.f32 %v245, 0.0
      %v276 = vmax.f32 %v248, 0.0
      %v277 = vmax.f32 %v253, 0.0
      %v278 = vmax.f32 %v256, 0.0
      %v279 = vmax.f32 %v261, 0.0
      %v280 = vmax.f32 %v264, 0.0
      %v281 = vmax.f32 %v269, 0.0
      %v282 = vmax.f32 %v272, 0.0
      %vm283 = vcmask 261120
      %284 = vst.msk [vmem:[%s172] sm:$0xff] %vm283, %v275
      %285 = vst.msk [vmem:[%s172 + $0x8] sm:$0xff] %vm283, %v276
      %286 = vst.msk [vmem:[%s172 + $0x10] sm:$0xff] %vm283, %v277
      %287 = vst.msk [vmem:[%s172 + $0x18] sm:$0xff] %vm283, %v278
      %288 = vst.msk [vmem:[%s172 + $0x20] sm:$0xff] %vm283, %v279
      %289 = vst.msk [vmem:[%s172 + $0x28] sm:$0xff] %vm283, %v280
      %290 = vst.msk [vmem:[%s172 + $0x30] sm:$0xff] %vm283, %v281
      %291 = vst.msk [vmem:[%s172 + $0x38] sm:$0xff] %vm283, %v282
      %s292 = smul.u32 8, %s14
      %p293 = scmp.lt.s32.totalorder %s292, 15
      %s294 = scalar_select %p293, %s292, 15
      %s295 = smul.addr %s294, 8
      %s296 = scalar_lea.vmem %s3, %s295
      // Predicated region
      $region33: #{fagcn_forward.4} parent=31 // pred_check
        %p297 = pneg %p100
      $region34: #{fagcn_forward.4} parent=31 // pred_check_branch
        %299 = sbr.rel (%p297) target = $region36
      $region35: #{fagcn_forward.4} parent=31 // pred_region
        %s300 = smul.u32 8, %s14
      $region36: #{fagcn_forward.4} parent=31 // pred_fallthru
        _
    $region32: #{fagcn_forward.4} parent=5 // pred_fallthru
      _
    %p301 = scmp.le.s32.totalorder 2, %s9
    // Predicated region
    $region37: #{fagcn_forward.4} parent=5 // pred_check
      %p302 = pneg %p301
    $region38: #{fagcn_forward.4} parent=5 // pred_check_branch
      %304 = sbr.rel (%p302) target = $region40
    $region39: #{fagcn_forward.4} parent=5 // pred_region
      %s305 = ssub.s32 %s9, 2
      // Predicated region
      $region41: #{fagcn_forward.4} parent=39 // pred_check
        %p306 = pneg %p106
      $region42: #{fagcn_forward.4} parent=39 // pred_check_branch
        %308 = sbr.rel (%p306) target = $region44
      $region43: #{fagcn_forward.4} parent=39 // pred_region
        %s309 = smul.u32 8, %s15
        %p310 = scmp.lt.s32.totalorder %s309, 15
        %s311 = scalar_select %p310, %s309, 15
        %s312 = smul.addr %s311, 8
        %s313 = scalar_lea.vmem %s3, %s312
      $region44: #{fagcn_forward.4} parent=39 // pred_fallthru
        _
    $region40: #{fagcn_forward.4} parent=5 // pred_fallthru
      _
  $region6: #{fagcn_forward.4} parent=0 // loop_footer
    %s13 = sadd.s32 1, %s9
  $region7: #{fagcn_forward.4} parent=0 // loop_footer_branch
    %8 = sbr.rel target = $region3
  $region8: #{fagcn_forward.4} parent=0 // loop_exit
    _

// kernel: fagcn_forward.7
$region0: #{fagcn_forward.7}
  #allocation0 [shape = 'u32[]', space=smem, size = 0x4, offset = 0x4, fixed_abs, tag = 'smem constant byte address 0x4 - core index']
  #allocation1 [shape = 'u32[144,128]{1,0:T(1,128)}', space=vmem, size = 0x12000, scoped, tag = 'internal scratch']
  %s0 = inlined_call_operand.vmem [shape: f32[128,32], index: 0, kind: input, shape index: {}]
  %s1 = inlined_call_operand.vmem [shape: f32[32,8], index: 1, kind: input, shape index: {}]
  %s2 = inlined_call_operand.vmem [shape: f32[1,8], index: 2, kind: input, shape index: {}]
  %s3 = inlined_call_operand.vmem [shape: f32[128,8], index: 3, kind: output, shape index: {}]
  %s4 = sld [smem:[#allocation0]]
  $region45: #{fagcn_forward.7} parent=0
    _
  %s6 = ssub.s32 1, %s4
  %s7 = scalar_select 0, %s6, %s4
  loop: start=0, step=1, limit=4
  $region2: #{fagcn_forward.7} parent=0 // loop_pre_header
    _
  $region3: #{fagcn_forward.7} parent=0 // loop_header
    %s9 = sphi 0, %s13
    %p10 = scmp.ge.s32.totalorder %s9, 4
    %s19 = sphi 0, %s21
    %s22 = sphi 0, %s19
    %s23 = sphi 0, %s22
    %s39 = sphi 0, %s23
    %s43 = sphi 0, %s43
    %s45 = sphi 0, %s43
    %s46 = sphi 0, %s45
    %s60 = sphi 0, %s46
    %s64 = sphi 0, %s64
    %s66 = sphi 0, %s64
    %s67 = sphi 0, %s66
    %s81 = sphi 0, %s67
    %s87 = sphi 0, %s89
    %s90 = sphi 0, %s87
    %s91 = sphi 0, %s90
    %s107 = sphi 0, %s91
  $region4: #{fagcn_forward.7} parent=0 // loop_header_branch
    %12 = sbr.rel (%p10) target = $region8
  $region5: #{fagcn_forward.7} parent=0 // loop_body
    %s14 = ssub.s32 %s9, 1
    %s15 = ssub.s32 %s9, 2
    %s16 = sadd.s32 %s9, 1
    %s17 = ssub.s32 %s9, %s16
    %p18 = scmp.eq.s32.totalorder %s17, 0
    %s20 = sadd.s32 %s19, 1
    %s21 = scalar_select %p18, %s19, %s20
    %p24 = pneg %p18
    %p25 = scmp.eq.s32.totalorder %s9, 1
    %p26 = por %p24, %p25
    %p27 = scmp.ne.s32.totalorder %s19, %s22
    %p28 = scmp.eq.s32.totalorder %s9, 0
    %p29 = por %p27, %p28
    %p30 = scmp.ne.s32.totalorder %s19, %s22
    %p31 = scmp.eq.s32.totalorder %s14, 1
    %p32 = por %p30, %p31
    %p33 = scmp.ne.s32.totalorder %s22, %s23
    %p34 = scmp.eq.s32.totalorder %s14, 0
    %p35 = por %p33, %p34
    %p36 = scmp.ne.s32.totalorder %s22, %s23
    %p37 = scmp.eq.s32.totalorder %s15, 1
    %p38 = por %p36, %p37
    %p40 = scmp.ne.s32.totalorder %s23, %s39
    %p41 = scmp.eq.s32.totalorder %s15, 0
    %p42 = por %p40, %p41
    %s44 = sadd.s32 %s43, 1
    %p47 = scmp.eq.s32.totalorder %s9, 1
    %p48 = scmp.ne.s32.totalorder %s43, %s45
    %p49 = scmp.eq.s32.totalorder %s9, 0
    %p50 = por %p48, %p49
    %p51 = scmp.ne.s32.totalorder %s43, %s45
    %p52 = scmp.eq.s32.totalorder %s14, 1
    %p53 = por %p51, %p52
    %p54 = scmp.ne.s32.totalorder %s45, %s46
    %p55 = scmp.eq.s32.totalorder %s14, 0
    %p56 = por %p54, %p55
    %p57 = scmp.ne.s32.totalorder %s45, %s46
    %p58 = scmp.eq.s32.totalorder %s15, 1
    %p59 = por %p57, %p58
    %p61 = scmp.ne.s32.totalorder %s46, %s60
    %p62 = scmp.eq.s32.totalorder %s15, 0
    %p63 = por %p61, %p62
    %s65 = sadd.s32 %s64, 1
    %p68 = scmp.eq.s32.totalorder %s9, 1
    %p69 = scmp.ne.s32.totalorder %s64, %s66
    %p70 = scmp.eq.s32.totalorder %s9, 0
    %p71 = por %p69, %p70
    %p72 = scmp.ne.s32.totalorder %s64, %s66
    %p73 = scmp.eq.s32.totalorder %s14, 1
    %p74 = por %p72, %p73
    %p75 = scmp.ne.s32.totalorder %s66, %s67
    %p76 = scmp.eq.s32.totalorder %s14, 0
    %p77 = por %p75, %p76
    %p78 = scmp.ne.s32.totalorder %s66, %s67
    %p79 = scmp.eq.s32.totalorder %s15, 1
    %p80 = por %p78, %p79
    %p82 = scmp.ne.s32.totalorder %s67, %s81
    %p83 = scmp.eq.s32.totalorder %s15, 0
    %p84 = por %p82, %p83
    %s85 = ssub.s32 %s9, %s16
    %p86 = scmp.eq.s32.totalorder %s85, 0
    %s88 = sadd.s32 %s87, 1
    %s89 = scalar_select %p86, %s87, %s88
    %p92 = pneg %p86
    %p93 = scmp.eq.s32.totalorder %s9, 1
    %p94 = por %p92, %p93
    %p95 = scmp.ne.s32.totalorder %s87, %s90
    %p96 = scmp.eq.s32.totalorder %s9, 0
    %p97 = por %p95, %p96
    %p98 = scmp.ne.s32.totalorder %s87, %s90
    %p99 = scmp.eq.s32.totalorder %s14, 1
    %p100 = por %p98, %p99
    %p101 = scmp.ne.s32.totalorder %s90, %s91
    %p102 = scmp.eq.s32.totalorder %s14, 0
    %p103 = por %p101, %p102
    %p104 = scmp.ne.s32.totalorder %s90, %s91
    %p105 = scmp.eq.s32.totalorder %s15, 1
    %p106 = por %p104, %p105
    %p108 = scmp.ne.s32.totalorder %s91, %s107
    %p109 = scmp.eq.s32.totalorder %s15, 0
    %p110 = por %p108, %p109
    %p111 = scmp.le.s32.totalorder 1, %s9
    %p112 = scmp.lt.s32.totalorder %s9, 3
    %p113 = pnand %p111, %p112
    %p114 = pneg %p113
    // Predicated region
    $region9: #{fagcn_forward.7} parent=5 // pred_check
      _
    $region10: #{fagcn_forward.7} parent=5 // pred_check_branch
      %116 = sbr.rel (%p113) target = $region12
    $region11: #{fagcn_forward.7} parent=5 // pred_region
      %s117 = ssub.s32 %s9, 1
      // Predicated region
      $region13: #{fagcn_forward.7} parent=11 // pred_check
        %p118 = pneg %p56
      $region14: #{fagcn_forward.7} parent=11 // pred_check_branch
        %120 = sbr.rel (%p118) target = $region16
      $region15: #{fagcn_forward.7} parent=11 // pred_region
        _
      $region16: #{fagcn_forward.7} parent=11 // pred_fallthru
        _
      // Predicated region
      $region17: #{fagcn_forward.7} parent=11 // pred_check
        %p121 = pneg %p77
      $region18: #{fagcn_forward.7} parent=11 // pred_check_branch
        %123 = sbr.rel (%p121) target = $region20
      $region19: #{fagcn_forward.7} parent=11 // pred_region
        _
      $region20: #{fagcn_forward.7} parent=11 // pred_fallthru
        _
    $region12: #{fagcn_forward.7} parent=5 // pred_fallthru
      _
    %p124 = scmp.lt.s32.totalorder %s9, 2
    // Predicated region
    $region21: #{fagcn_forward.7} parent=5 // pred_check
      %p125 = pneg %p124
    $region22: #{fagcn_forward.7} parent=5 // pred_check_branch
      %127 = sbr.rel (%p125) target = $region24
    $region23: #{fagcn_forward.7} parent=5 // pred_region
      // Predicated region
      $region25: #{fagcn_forward.7} parent=23 // pred_check
        %p128 = pneg %p29
      $region26: #{fagcn_forward.7} parent=23 // pred_check_branch
        %130 = sbr.rel (%p128) target = $region28
      $region27: #{fagcn_forward.7} parent=23 // pred_region
        %s131 = smul.u32 8, %s9
        %p132 = scmp.lt.s32.totalorder %s131, 15
        %s133 = scalar_select %p132, %s131, 15
        %s134 = smul.addr %s133, 8
        %s135 = scalar_lea.vmem %s0, %s134
        %s136 = smul.u32 8, %s9
      $region28: #{fagcn_forward.7} parent=23 // pred_fallthru
        _
    $region24: #{fagcn_forward.7} parent=5 // pred_fallthru
      _
    %p137 = scmp.le.s32.totalorder 1, %s9
    %p138 = scmp.lt.s32.totalorder %s9, 3
    %p139 = pnand %p137, %p138
    %p140 = pneg %p139
    // Predicated region
    $region29: #{fagcn_forward.7} parent=5 // pred_check
      _
    $region30: #{fagcn_forward.7} parent=5 // pred_check_branch
      %142 = sbr.rel (%p139) target = $region32
    $region31: #{fagcn_forward.7} parent=5 // pred_region
      %s143 = ssub.s32 %s9, 1
      %s144 = smul.u32 8, %s14
      %p145 = scmp.lt.s32.totalorder %s144, 15
      %s146 = scalar_select %p145, %s144, 15
      %s147 = smul.addr %s146, 8
      %s148 = scalar_lea.vmem %s0, %s147
      %p149 = pneg %p35
      %p150 = pneg %p32
      %p151 = pneg %p56
      %p152 = pneg %p53
      %p153 = pneg %p77
      %p154 = pneg %p74
      %p155 = pneg %p103
      %p156 = pneg %p100
      %s157 = smul.u32 8, %s14
      %p158 = scmp.lt.s32.totalorder %s157, 15
      %s159 = scalar_select %p158, %s157, 15
      %s160 = smul.addr %s159, 8
      %s161 = scalar_lea.vmem %s3, %s160
      %s162 = smul.u32 8, %s14
      %p163 = scmp.lt.s32.totalorder %s162, 15
      %s164 = scalar_select %p163, %s162, 15
      %s165 = smul.addr %s164, 8
      %s166 = scalar_lea.vmem %s0, %s165
      %s167 = smul.u32 8, %s14
      %s168 = smul.u32 8, %s14
      %p169 = scmp.lt.s32.totalorder %s168, 15
      %s170 = scalar_select %p169, %s168, 15
      %s171 = smul.addr %s170, 8
      %s172 = scalar_lea.vmem %s3, %s171
      %s173 = smul.u32 8, %s14
      %v174 = vld [vmem:[%s166] sm:$0xff]
      %v175 = vld [vmem:[%s166 + $0x8] sm:$0xff]
      %v176 = vld [vmem:[%s166 + $0x10] sm:$0xff]
      %v177 = vld [vmem:[%s166 + $0x18] sm:$0xff]
      %v178 = vld [vmem:[%s166 + $0x20] sm:$0xff]
      %v179 = vld [vmem:[%s166 + $0x28] sm:$0xff]
      %v180 = vld [vmem:[%s166 + $0x30] sm:$0xff]
      %v181 = vld [vmem:[%s166 + $0x38] sm:$0xff]
      %v182 = vld [vmem:[%s1] sm:$0xff]
      %v183 = vld [vmem:[%s1 + $0x8] sm:$0xff]
      %v184 = vld [vmem:[%s1 + $0x10] sm:$0xff]
      %v185 = vld [vmem:[%s1 + $0x18] sm:$0xff]
      %v186 = vld [vmem:[%s2] sm:$0x1]
      %v188 = vlaneseq
      %v189 = vshrl.u32 %v188, 7
      %v190 = vsub.s32 0, %v189
      %v191 = vrot.slane %v186, %v190
      %vm193 = vcmask 261120
      %v195 = vsel %vm193, %v174, 0
      %v198 = vsel %vm193, %v175, 0
      %v201 = vsel %vm193, %v176, 0
      %v204 = vsel %vm193, %v177, 0
      %v207 = vsel %vm193, %v178, 0
      %v210 = vsel %vm193, %v179, 0
      %v213 = vsel %vm193, %v180, 0
      %v216 = vsel %vm193, %v181, 0
      %218 = vmatprep.subr.mxu0 0.0
      %219 = vmatpush1.msra.mxu0 0.0
      %220 = vmatprep.subr.mxu0 0.0
      %221 = vmatpush1.msra.mxu0 0.0
      %222 = vmatprep.subr.mxu0 0.0
      %223 = vmatpush1.msra.mxu0 0.0
      %224 = vmatprep.subr.mxu0 0.0
      %225 = vmatpush1.msra.mxu0 0.0
      %226 = vmatprep.subr.mxu0 0.0
      %227 = vmatpush1.msra.mxu0 0.0
      %228 = vmatprep.subr.mxu0 0.0
      %229 = vmatpush1.msra.mxu0 0.0
      %230 = vmatprep.subr.mxu0 0.0
      %231 = vmatpush1.msra.mxu0 0.0
      %232 = vmatprep.subr.mxu0 0.0
      %233 = vmatpush1.msra.mxu0 0.0
      %234 = vmatprep.subr.mxu0 0.0
      %235 = vmatpush1.msra.mxu0 0.0
      %236 = vmatprep.subr.mxu0 0.0
      %237 = vmatpush1.msra.mxu0 0.0
      %238 = vmatprep.subr.mxu0 0.0
      %239 = vmatpush1.msra.mxu0 0.0
      %240 = vmatprep.subr.mxu0 0.0
      %241 = vmatpush1.msra.mxu0 0.0
      %242 = vmatprep.subr.mxu0 0.0
      %243 = vmatpush1.msra.mxu0 %v185
      %244 = vmatprep.subr.mxu0 0.0
      %245 = vmatpush1.msra.mxu0 %v184
      %246 = vmatprep.subr.mxu0 0.0
      %247 = vmatpush1.msra.mxu0 %v183
      %248 = vmatprep.subr.mxu0 0.0
      %249 = vmatpush1.msra.mxu0 %v182
      %250 = vmatprep.subr.mxu0 0.0
      %251 = vmatpush2.msra.mxu0 0.0
      %252 = vmatprep.subr.mxu0 0.0
      %253 = vmatpush2.msra.mxu0 0.0
      %254 = vmatprep.subr.mxu0 0.0
      %255 = vmatpush2.msra.mxu0 0.0
      %256 = vmatprep.subr.mxu0 0.0
      %257 = vmatpush2.msra.mxu0 0.0
      %258 = vmatprep.subr.mxu0 0.0
      %259 = vmatpush2.msra.mxu0 0.0
      %260 = vmatprep.subr.mxu0 0.0
      %261 = vmatpush2.msra.mxu0 0.0
      %262 = vmatprep.subr.mxu0 0.0
      %263 = vmatpush2.msra.mxu0 0.0
      %264 = vmatprep.subr.mxu0 0.0
      %265 = vmatpush2.msra.mxu0 0.0
      %266 = vmatprep.subr.mxu0 0.0
      %267 = vmatpush2.msra.mxu0 0.0
      %268 = vmatprep.subr.mxu0 0.0
      %269 = vmatpush2.msra.mxu0 0.0
      %270 = vmatprep.subr.mxu0 0.0
      %271 = vmatpush2.msra.mxu0 0.0
      %272 = vmatprep.subr.mxu0 0.0
      %273 = vmatpush2.msra.mxu0 0.0
      %274 = vmatprep.subr.mxu0 0.0
      %275 = vmatpush2.msra.mxu0 0.0
      %276 = vmatprep.subr.mxu0 0.0
      %277 = vmatpush2.msra.mxu0 0.0
      %278 = vmatprep.subr.mxu0 0.0
      %279 = vmatpush2.msra.mxu0 0.0
      %280 = vmatprep.subr.mxu0 0.0
      %281 = vmatpush2.msra.mxu0 0.0
      %282 = vmatprep.mubr.f32.mxu0 0.0
      %283 = vmatmul.mubr.f32.gmra.mxu0 %v195
      %v284 = vpop.f32.mrf.mxu0
      %v285 = vadd.f32 %v191, %v284
      %v286 = vpop.f32.mrf.mxu0
      %287 = vmatprep.mubr.f32.mxu0 0.0
      %288 = vmatmul.mubr.f32.gmra.mxu0 %v198
      %v289 = vpop.f32.mrf.mxu0
      %v290 = vadd.f32 %v191, %v289
      %v291 = vpop.f32.mrf.mxu0
      %292 = vmatprep.mubr.f32.mxu0 0.0
      %293 = vmatmul.mubr.f32.gmra.mxu0 %v201
      %v294 = vpop.f32.mrf.mxu0
      %v295 = vadd.f32 %v191, %v294
      %v296 = vpop.f32.mrf.mxu0
      %297 = vmatprep.mubr.f32.mxu0 0.0
      %298 = vmatmul.mubr.f32.gmra.mxu0 %v204
      %v299 = vpop.f32.mrf.mxu0
      %v300 = vadd.f32 %v191, %v299
      %v301 = vpop.f32.mrf.mxu0
      %302 = vmatprep.mubr.f32.mxu0 0.0
      %303 = vmatmul.mubr.f32.gmra.mxu0 %v207
      %v304 = vpop.f32.mrf.mxu0
      %v305 = vadd.f32 %v191, %v304
      %v306 = vpop.f32.mrf.mxu0
      %307 = vmatprep.mubr.f32.mxu0 0.0
      %308 = vmatmul.mubr.f32.gmra.mxu0 %v210
      %v309 = vpop.f32.mrf.mxu0
      %v310 = vadd.f32 %v191, %v309
      %v311 = vpop.f32.mrf.mxu0
      %312 = vmatprep.mubr.f32.mxu0 0.0
      %313 = vmatmul.mubr.f32.gmra.mxu0 %v213
      %v314 = vpop.f32.mrf.mxu0
      %v315 = vadd.f32 %v191, %v314
      %v316 = vpop.f32.mrf.mxu0
      %317 = vmatprep.mubr.f32.mxu0 0.0
      %318 = vmatmul.mubr.f32.gmra.mxu0 %v216
      %v319 = vpop.f32.mrf.mxu0
      %v320 = vadd.f32 %v191, %v319
      %v321 = vpop.f32.mrf.mxu0
      %322 = vdwg.mxu0
      %vm323 = vcmask 64512
      %v324 = vsel %vm323, %v285, -inf
      %325 = vmax.xlane.f32.xlu0 %v324
      %v326 = vpop.xlane.xlu0 %325
      %v327 = vsel %vm323, %v290, -inf
      %328 = vmax.xlane.f32.xlu0 %v327
      %v329 = vpop.xlane.xlu0 %328
      %v330 = vsel %vm323, %v295, -inf
      %331 = vmax.xlane.f32.xlu0 %v330
      %v332 = vpop.xlane.xlu0 %331
      %v333 = vsel %vm323, %v300, -inf
      %334 = vmax.xlane.f32.xlu0 %v333
      %v335 = vpop.xlane.xlu0 %334
      %v336 = vsel %vm323, %v305, -inf
      %337 = vmax.xlane.f32.xlu0 %v336
      %v338 = vpop.xlane.xlu0 %337
      %v339 = vsel %vm323, %v310, -inf
      %340 = vmax.xlane.f32.xlu0 %v339
      %v341 = vpop.xlane.xlu0 %340
      %v342 = vsel %vm323, %v315, -inf
      %343 = vmax.xlane.f32.xlu0 %v342
      %v344 = vpop.xlane.xlu0 %343
      %v345 = vsel %vm323, %v320, -inf
      %346 = vmax.xlane.f32.xlu0 %v345
      %v347 = vpop.xlane.xlu0 %346
      %v348 = vsub.f32 %v285, %v326
      %v349 = vsub.f32 %v290, %v329
      %v350 = vsub.f32 %v295, %v332
      %v351 = vsub.f32 %v300, %v335
      %v352 = vsub.f32 %v305, %v338
      %v353 = vsub.f32 %v310, %v341
      %v354 = vsub.f32 %v315, %v344
      %v355 = vsub.f32 %v320, %v347
      %v356 = vmul.f32 %v348, 1.442695
      %v357 = vpow.pop %v356
      %v358 = vmul.f32 %v349, 1.442695
      %v359 = vpow.pop %v358
      %v360 = vmul.f32 %v350, 1.442695
      %v361 = vpow.pop %v360
      %v362 = vmul.f32 %v351, 1.442695
      %v363 = vpow.pop %v362
      %v364 = vmul.f32 %v352, 1.442695
      %v365 = vpow.pop %v364
      %v366 = vmul.f32 %v353, 1.442695
      %v367 = vpow.pop %v366
      %v368 = vmul.f32 %v354, 1.442695
      %v369 = vpow.pop %v368
      %v370 = vmul.f32 %v355, 1.442695
      %v371 = vpow.pop %v370
      %v372 = vsel %vm323, %v357, 0.0
      %373 = vadd.xlane.f32.xlu0 %v372
      %v374 = vpop.xlane.xlu0 %373
      %v375 = vsel %vm323, %v359, 0.0
      %376 = vadd.xlane.f32.xlu0 %v375
      %v377 = vpop.xlane.xlu0 %376
      %v378 = vsel %vm323, %v361, 0.0
      %379 = vadd.xlane.f32.xlu0 %v378
      %v380 = vpop.xlane.xlu0 %379
      %v381 = vsel %vm323, %v363, 0.0
      %382 = vadd.xlane.f32.xlu0 %v381
      %v383 = vpop.xlane.xlu0 %382
      %v384 = vsel %vm323, %v365, 0.0
      %385 = vadd.xlane.f32.xlu0 %v384
      %v386 = vpop.xlane.xlu0 %385
      %v387 = vsel %vm323, %v367, 0.0
      %388 = vadd.xlane.f32.xlu0 %v387
      %v389 = vpop.xlane.xlu0 %388
      %v390 = vsel %vm323, %v369, 0.0
      %391 = vadd.xlane.f32.xlu0 %v390
      %v392 = vpop.xlane.xlu0 %391
      %v393 = vsel %vm323, %v371, 0.0
      %394 = vadd.xlane.f32.xlu0 %v393
      %v395 = vpop.xlane.xlu0 %394
      %v396 = vlog2.pop %v374
      %v397 = vmul.f32 %v396, 0.6931472
      %v398 = vlog2.pop %v377
      %v399 = vmul.f32 %v398, 0.6931472
      %v400 = vlog2.pop %v380
      %v401 = vmul.f32 %v400, 0.6931472
      %v402 = vlog2.pop %v383
      %v403 = vmul.f32 %v402, 0.6931472
      %v404 = vlog2.pop %v386
      %v405 = vmul.f32 %v404, 0.6931472
      %v406 = vlog2.pop %v389
      %v407 = vmul.f32 %v406, 0.6931472
      %v408 = vlog2.pop %v392
      %v409 = vmul.f32 %v408, 0.6931472
      %v410 = vlog2.pop %v395
      %v411 = vmul.f32 %v410, 0.6931472
      %v412 = vadd.f32 %v326, %v397
      %v413 = vadd.f32 %v329, %v399
      %v414 = vadd.f32 %v332, %v401
      %v415 = vadd.f32 %v335, %v403
      %v416 = vadd.f32 %v338, %v405
      %v417 = vadd.f32 %v341, %v407
      %v418 = vadd.f32 %v344, %v409
      %v419 = vadd.f32 %v347, %v411
      %v420 = vsub.f32 %v285, %v412
      %v421 = vsub.f32 %v290, %v413
      %v422 = vsub.f32 %v295, %v414
      %v423 = vsub.f32 %v300, %v415
      %v424 = vsub.f32 %v305, %v416
      %v425 = vsub.f32 %v310, %v417
      %v426 = vsub.f32 %v315, %v418
      %v427 = vsub.f32 %v320, %v419
      %428 = vst.msk [vmem:[%s172] sm:$0xff] %vm323, %v420
      %429 = vst.msk [vmem:[%s172 + $0x8] sm:$0xff] %vm323, %v421
      %430 = vst.msk [vmem:[%s172 + $0x10] sm:$0xff] %vm323, %v422
      %431 = vst.msk [vmem:[%s172 + $0x18] sm:$0xff] %vm323, %v423
      %432 = vst.msk [vmem:[%s172 + $0x20] sm:$0xff] %vm323, %v424
      %433 = vst.msk [vmem:[%s172 + $0x28] sm:$0xff] %vm323, %v425
      %434 = vst.msk [vmem:[%s172 + $0x30] sm:$0xff] %vm323, %v426
      %435 = vst.msk [vmem:[%s172 + $0x38] sm:$0xff] %vm323, %v427
      %s436 = smul.u32 8, %s14
      %p437 = scmp.lt.s32.totalorder %s436, 15
      %s438 = scalar_select %p437, %s436, 15
      %s439 = smul.addr %s438, 8
      %s440 = scalar_lea.vmem %s3, %s439
      // Predicated region
      $region33: #{fagcn_forward.7} parent=31 // pred_check
        %p441 = pneg %p100
      $region34: #{fagcn_forward.7} parent=31 // pred_check_branch
        %443 = sbr.rel (%p441) target = $region36
      $region35: #{fagcn_forward.7} parent=31 // pred_region
        %s444 = smul.u32 8, %s14
      $region36: #{fagcn_forward.7} parent=31 // pred_fallthru
        _
    $region32: #{fagcn_forward.7} parent=5 // pred_fallthru
      _
    %p445 = scmp.le.s32.totalorder 2, %s9
    // Predicated region
    $region37: #{fagcn_forward.7} parent=5 // pred_check
      %p446 = pneg %p445
    $region38: #{fagcn_forward.7} parent=5 // pred_check_branch
      %448 = sbr.rel (%p446) target = $region40
    $region39: #{fagcn_forward.7} parent=5 // pred_region
      %s449 = ssub.s32 %s9, 2
      // Predicated region
      $region41: #{fagcn_forward.7} parent=39 // pred_check
        %p450 = pneg %p106
      $region42: #{fagcn_forward.7} parent=39 // pred_check_branch
        %452 = sbr.rel (%p450) target = $region44
      $region43: #{fagcn_forward.7} parent=39 // pred_region
        %s453 = smul.u32 8, %s15
        %p454 = scmp.lt.s32.totalorder %s453, 15
        %s455 = scalar_select %p454, %s453, 15
        %s456 = smul.addr %s455, 8
        %s457 = scalar_lea.vmem %s3, %s456
      $region44: #{fagcn_forward.7} parent=39 // pred_fallthru
        _
    $region40: #{fagcn_forward.7} parent=5 // pred_fallthru
      _
  $region6: #{fagcn_forward.7} parent=0 // loop_footer
    %s13 = sadd.s32 1, %s9
  $region7: #{fagcn_forward.7} parent=0 // loop_footer_branch
    %8 = sbr.rel target = $region3
  $region8: #{fagcn_forward.7} parent=0 // loop_exit
    _

// kernel: fagcn_forward.5
$region0: #{fagcn_forward.5}
  #allocation0 [shape = 'u32[]', space=smem, size = 0x4, offset = 0x4, fixed_abs, tag = 'smem constant byte address 0x4 - core index']
  #allocation1 [shape = 'u32[144,128]{1,0:T(1,128)}', space=vmem, size = 0x12000, scoped, tag = 'internal scratch']
  %s0 = inlined_call_operand.vmem [shape: f32[128,32], index: 0, kind: input, shape index: {}]
  %s1 = inlined_call_operand.vmem [shape: bf16[128,128], index: 1, kind: input, shape index: {}]
  %s2 = inlined_call_operand.vmem [shape: f32[128,1], index: 2, kind: input, shape index: {}]
  %s3 = inlined_call_operand.vmem [shape: f32[1,128], index: 3, kind: input, shape index: {}]
  %s4 = inlined_call_operand.vmem [shape: bf16[128,32], index: 4, kind: input, shape index: {}]
  %s5 = inlined_call_operand.vmem [shape: f32[128,32], index: 5, kind: output, shape index: {}]
  %s6 = sld [smem:[#allocation0]]
  $region53: #{fagcn_forward.5} parent=0
    _
  %s8 = ssub.s32 1, %s6
  %s9 = scalar_select 0, %s8, %s6
  loop: start=0, step=1, limit=4
  $region2: #{fagcn_forward.5} parent=0 // loop_pre_header
    _
  $region3: #{fagcn_forward.5} parent=0 // loop_header
    %s11 = sphi 0, %s15
    %p12 = scmp.ge.s32.totalorder %s11, 4
    %s21 = sphi 0, %s23
    %s24 = sphi 0, %s21
    %s25 = sphi 0, %s24
    %s41 = sphi 0, %s25
    %s47 = sphi 0, %s49
    %s50 = sphi 0, %s47
    %s51 = sphi 0, %s50
    %s67 = sphi 0, %s51
    %s73 = sphi 0, %s75
    %s76 = sphi 0, %s73
    %s77 = sphi 0, %s76
    %s93 = sphi 0, %s77
    %s97 = sphi 0, %s97
    %s99 = sphi 0, %s97
    %s100 = sphi 0, %s99
    %s114 = sphi 0, %s100
    %s118 = sphi 0, %s118
    %s120 = sphi 0, %s118
    %s121 = sphi 0, %s120
    %s135 = sphi 0, %s121
    %s141 = sphi 0, %s143
    %s144 = sphi 0, %s141
    %s145 = sphi 0, %s144
    %s161 = sphi 0, %s145
  $region4: #{fagcn_forward.5} parent=0 // loop_header_branch
    %14 = sbr.rel (%p12) target = $region8
  $region5: #{fagcn_forward.5} parent=0 // loop_body
    %s16 = ssub.s32 %s11, 1
    %s17 = ssub.s32 %s11, 2
    %s18 = sadd.s32 %s11, 1
    %s19 = ssub.s32 %s11, %s18
    %p20 = scmp.eq.s32.totalorder %s19, 0
    %s22 = sadd.s32 %s21, 1
    %s23 = scalar_select %p20, %s21, %s22
    %p26 = pneg %p20
    %p27 = scmp.eq.s32.totalorder %s11, 1
    %p28 = por %p26, %p27
    %p29 = scmp.ne.s32.totalorder %s21, %s24
    %p30 = scmp.eq.s32.totalorder %s11, 0
    %p31 = por %p29, %p30
    %p32 = scmp.ne.s32.totalorder %s21, %s24
    %p33 = scmp.eq.s32.totalorder %s16, 1
    %p34 = por %p32, %p33
    %p35 = scmp.ne.s32.totalorder %s24, %s25
    %p36 = scmp.eq.s32.totalorder %s16, 0
    %p37 = por %p35, %p36
    %p38 = scmp.ne.s32.totalorder %s24, %s25
    %p39 = scmp.eq.s32.totalorder %s17, 1
    %p40 = por %p38, %p39
    %p42 = scmp.ne.s32.totalorder %s25, %s41
    %p43 = scmp.eq.s32.totalorder %s17, 0
    %p44 = por %p42, %p43
    %s45 = ssub.s32 %s11, %s18
    %p46 = scmp.eq.s32.totalorder %s45, 0
    %s48 = sadd.s32 %s47, 1
    %s49 = scalar_select %p46, %s47, %s48
    %p52 = pneg %p46
    %p53 = scmp.eq.s32.totalorder %s11, 1
    %p54 = por %p52, %p53
    %p55 = scmp.ne.s32.totalorder %s47, %s50
    %p56 = scmp.eq.s32.totalorder %s11, 0
    %p57 = por %p55, %p56
    %p58 = scmp.ne.s32.totalorder %s47, %s50
    %p59 = scmp.eq.s32.totalorder %s16, 1
    %p60 = por %p58, %p59
    %p61 = scmp.ne.s32.totalorder %s50, %s51
    %p62 = scmp.eq.s32.totalorder %s16, 0
    %p63 = por %p61, %p62
    %p64 = scmp.ne.s32.totalorder %s50, %s51
    %p65 = scmp.eq.s32.totalorder %s17, 1
    %p66 = por %p64, %p65
    %p68 = scmp.ne.s32.totalorder %s51, %s67
    %p69 = scmp.eq.s32.totalorder %s17, 0
    %p70 = por %p68, %p69
    %s71 = ssub.s32 %s11, %s18
    %p72 = scmp.eq.s32.totalorder %s71, 0
    %s74 = sadd.s32 %s73, 1
    %s75 = scalar_select %p72, %s73, %s74
    %p78 = pneg %p72
    %p79 = scmp.eq.s32.totalorder %s11, 1
    %p80 = por %p78, %p79
    %p81 = scmp.ne.s32.totalorder %s73, %s76
    %p82 = scmp.eq.s32.totalorder %s11, 0
    %p83 = por %p81, %p82
    %p84 = scmp.ne.s32.totalorder %s73, %s76
    %p85 = scmp.eq.s32.totalorder %s16, 1
    %p86 = por %p84, %p85
    %p87 = scmp.ne.s32.totalorder %s76, %s77
    %p88 = scmp.eq.s32.totalorder %s16, 0
    %p89 = por %p87, %p88
    %p90 = scmp.ne.s32.totalorder %s76, %s77
    %p91 = scmp.eq.s32.totalorder %s17, 1
    %p92 = por %p90, %p91
    %p94 = scmp.ne.s32.totalorder %s77, %s93
    %p95 = scmp.eq.s32.totalorder %s17, 0
    %p96 = por %p94, %p95
    %s98 = sadd.s32 %s97, 1
    %p101 = scmp.eq.s32.totalorder %s11, 1
    %p102 = scmp.ne.s32.totalorder %s97, %s99
    %p103 = scmp.eq.s32.totalorder %s11, 0
    %p104 = por %p102, %p103
    %p105 = scmp.ne.s32.totalorder %s97, %s99
    %p106 = scmp.eq.s32.totalorder %s16, 1
    %p107 = por %p105, %p106
    %p108 = scmp.ne.s32.totalorder %s99, %s100
    %p109 = scmp.eq.s32.totalorder %s16, 0
    %p110 = por %p108, %p109
    %p111 = scmp.ne.s32.totalorder %s99, %s100
    %p112 = scmp.eq.s32.totalorder %s17, 1
    %p113 = por %p111, %p112
    %p115 = scmp.ne.s32.totalorder %s100, %s114
    %p116 = scmp.eq.s32.totalorder %s17, 0
    %p117 = por %p115, %p116
    %s119 = sadd.s32 %s118, 1
    %p122 = scmp.eq.s32.totalorder %s11, 1
    %p123 = scmp.ne.s32.totalorder %s118, %s120
    %p124 = scmp.eq.s32.totalorder %s11, 0
    %p125 = por %p123, %p124
    %p126 = scmp.ne.s32.totalorder %s118, %s120
    %p127 = scmp.eq.s32.totalorder %s16, 1
    %p128 = por %p126, %p127
    %p129 = scmp.ne.s32.totalorder %s120, %s121
    %p130 = scmp.eq.s32.totalorder %s16, 0
    %p131 = por %p129, %p130
    %p132 = scmp.ne.s32.totalorder %s120, %s121
    %p133 = scmp.eq.s32.totalorder %s17, 1
    %p134 = por %p132, %p133
    %p136 = scmp.ne.s32.totalorder %s121, %s135
    %p137 = scmp.eq.s32.totalorder %s17, 0
    %p138 = por %p136, %p137
    %s139 = ssub.s32 %s11, %s18
    %p140 = scmp.eq.s32.totalorder %s139, 0
    %s142 = sadd.s32 %s141, 1
    %s143 = scalar_select %p140, %s141, %s142
    %p146 = pneg %p140
    %p147 = scmp.eq.s32.totalorder %s11, 1
    %p148 = por %p146, %p147
    %p149 = scmp.ne.s32.totalorder %s141, %s144
    %p150 = scmp.eq.s32.totalorder %s11, 0
    %p151 = por %p149, %p150
    %p152 = scmp.ne.s32.totalorder %s141, %s144
    %p153 = scmp.eq.s32.totalorder %s16, 1
    %p154 = por %p152, %p153
    %p155 = scmp.ne.s32.totalorder %s144, %s145
    %p156 = scmp.eq.s32.totalorder %s16, 0
    %p157 = por %p155, %p156
    %p158 = scmp.ne.s32.totalorder %s144, %s145
    %p159 = scmp.eq.s32.totalorder %s17, 1
    %p160 = por %p158, %p159
    %p162 = scmp.ne.s32.totalorder %s145, %s161
    %p163 = scmp.eq.s32.totalorder %s17, 0
    %p164 = por %p162, %p163
    %p165 = scmp.le.s32.totalorder 1, %s11
    %p166 = scmp.lt.s32.totalorder %s11, 3
    %p167 = pnand %p165, %p166
    %p168 = pneg %p167
    // Predicated region
    $region9: #{fagcn_forward.5} parent=5 // pred_check
      _
    $region10: #{fagcn_forward.5} parent=5 // pred_check_branch
      %170 = sbr.rel (%p167) target = $region12
    $region11: #{fagcn_forward.5} parent=5 // pred_region
      %s171 = ssub.s32 %s11, 1
      // Predicated region
      $region13: #{fagcn_forward.5} parent=11 // pred_check
        %p172 = pneg %p110
      $region14: #{fagcn_forward.5} parent=11 // pred_check_branch
        %174 = sbr.rel (%p172) target = $region16
      $region15: #{fagcn_forward.5} parent=11 // pred_region
        _
      $region16: #{fagcn_forward.5} parent=11 // pred_fallthru
        _
      // Predicated region
      $region17: #{fagcn_forward.5} parent=11 // pred_check
        %p175 = pneg %p131
      $region18: #{fagcn_forward.5} parent=11 // pred_check_branch
        %177 = sbr.rel (%p175) target = $region20
      $region19: #{fagcn_forward.5} parent=11 // pred_region
        _
      $region20: #{fagcn_forward.5} parent=11 // pred_fallthru
        _
    $region12: #{fagcn_forward.5} parent=5 // pred_fallthru
      _
    %p178 = scmp.lt.s32.totalorder %s11, 2
    // Predicated region
    $region21: #{fagcn_forward.5} parent=5 // pred_check
      %p179 = pneg %p178
    $region22: #{fagcn_forward.5} parent=5 // pred_check_branch
      %181 = sbr.rel (%p179) target = $region24
    $region23: #{fagcn_forward.5} parent=5 // pred_region
      // Predicated region
      $region25: #{fagcn_forward.5} parent=23 // pred_check
        %p182 = pneg %p31
      $region26: #{fagcn_forward.5} parent=23 // pred_check_branch
        %184 = sbr.rel (%p182) target = $region28
      $region27: #{fagcn_forward.5} parent=23 // pred_region
        %s185 = smul.u32 8, %s11
        %p186 = scmp.lt.s32.totalorder %s185, 15
        %s187 = scalar_select %p186, %s185, 15
        %s188 = smul.addr %s187, 8
        %s189 = scalar_lea.vmem %s0, %s188
        %s190 = smul.u32 8, %s11
      $region28: #{fagcn_forward.5} parent=23 // pred_fallthru
        _
      // Predicated region
      $region29: #{fagcn_forward.5} parent=23 // pred_check
        %p191 = pneg %p57
      $region30: #{fagcn_forward.5} parent=23 // pred_check_branch
        %193 = sbr.rel (%p191) target = $region32
      $region31: #{fagcn_forward.5} parent=23 // pred_region
        %s194 = smul.u32 8, %s11
        %p195 = scmp.lt.s32.totalorder %s194, 15
        %s196 = scalar_select %p195, %s194, 15
        %s197 = smul.addr %s196, 4
        %s198 = scalar_lea.vmem %s1, %s197
        %s199 = smul.u32 8, %s11
      $region32: #{fagcn_forward.5} parent=23 // pred_fallthru
        _
      // Predicated region
      $region33: #{fagcn_forward.5} parent=23 // pred_check
        %p200 = pneg %p83
      $region34: #{fagcn_forward.5} parent=23 // pred_check_branch
        %202 = sbr.rel (%p200) target = $region36
      $region35: #{fagcn_forward.5} parent=23 // pred_region
        %s203 = smul.u32 8, %s11
        %p204 = scmp.lt.s32.totalorder %s203, 15
        %s205 = scalar_select %p204, %s203, 15
        %s206 = smul.addr %s205, 8
        %s207 = scalar_lea.vmem %s2, %s206
        %s208 = smul.u32 8, %s11
      $region36: #{fagcn_forward.5} parent=23 // pred_fallthru
        _
    $region24: #{fagcn_forward.5} parent=5 // pred_fallthru
      _
    %p209 = scmp.le.s32.totalorder 1, %s11
    %p210 = scmp.lt.s32.totalorder %s11, 3
    %p211 = pnand %p209, %p210
    %p212 = pneg %p211
    // Predicated region
    $region37: #{fagcn_forward.5} parent=5 // pred_check
      _
    $region38: #{fagcn_forward.5} parent=5 // pred_check_branch
      %214 = sbr.rel (%p211) target = $region40
    $region39: #{fagcn_forward.5} parent=5 // pred_region
      %s215 = ssub.s32 %s11, 1
      %s216 = smul.u32 8, %s16
      %p217 = scmp.lt.s32.totalorder %s216, 15
      %s218 = scalar_select %p217, %s216, 15
      %s219 = smul.addr %s218, 8
      %s220 = scalar_lea.vmem %s0, %s219
      %p221 = pneg %p37
      %p222 = pneg %p34
      %s223 = smul.u32 8, %s16
      %p224 = scmp.lt.s32.totalorder %s223, 15
      %s225 = scalar_select %p224, %s223, 15
      %s226 = smul.addr %s225, 4
      %s227 = scalar_lea.vmem %s1, %s226
      %p228 = pneg %p63
      %p229 = pneg %p60
      %s230 = smul.u32 8, %s16
      %p231 = scmp.lt.s32.totalorder %s230, 15
      %s232 = scalar_select %p231, %s230, 15
      %s233 = smul.addr %s232, 8
      %s234 = scalar_lea.vmem %s2, %s233
      %p235 = pneg %p89
      %p236 = pneg %p86
      %p237 = pneg %p110
      %p238 = pneg %p107
      %p239 = pneg %p131
      %p240 = pneg %p128
      %p241 = pneg %p157
      %p242 = pneg %p154
      %s243 = smul.u32 8, %s16
      %p244 = scmp.lt.s32.totalorder %s243, 15
      %s245 = scalar_select %p244, %s243, 15
      %s246 = smul.addr %s245, 8
      %s247 = scalar_lea.vmem %s5, %s246
      %s248 = smul.u32 8, %s16
      %p249 = scmp.lt.s32.totalorder %s248, 15
      %s250 = scalar_select %p249, %s248, 15
      %s251 = smul.addr %s250, 8
      %s252 = scalar_lea.vmem %s0, %s251
      %s253 = smul.u32 8, %s16
      %s254 = smul.u32 8, %s16
      %p255 = scmp.lt.s32.totalorder %s254, 15
      %s256 = scalar_select %p255, %s254, 15
      %s257 = smul.addr %s256, 4
      %s258 = scalar_lea.vmem %s1, %s257
      %s259 = smul.u32 8, %s16
      %s260 = smul.u32 8, %s16
      %p261 = scmp.lt.s32.totalorder %s260, 15
      %s262 = scalar_select %p261, %s260, 15
      %s263 = smul.addr %s262, 8
      %s264 = scalar_lea.vmem %s2, %s263
      %s265 = smul.u32 8, %s16
      %s266 = smul.u32 8, %s16
      %p267 = scmp.lt.s32.totalorder %s266, 15
      %s268 = scalar_select %p267, %s266, 15
      %s269 = smul.addr %s268, 8
      %s270 = scalar_lea.vmem %s5, %s269
      %s271 = smul.u32 8, %s16
      %v273 = vld [vmem:[%s264] sm:$0xff]
      %v274 = vld [vmem:[%s264 + $0x8] sm:$0xff]
      %v275 = vld [vmem:[%s264 + $0x10] sm:$0xff]
      %v276 = vld [vmem:[%s264 + $0x18] sm:$0xff]
      %v277 = vld [vmem:[%s264 + $0x20] sm:$0xff]
      %v278 = vld [vmem:[%s264 + $0x28] sm:$0xff]
      %v279 = vld [vmem:[%s264 + $0x30] sm:$0xff]
      %v280 = vld [vmem:[%s264 + $0x38] sm:$0xff]
      %v281 = vld [vmem:[%s3] sm:$0x1]
      %283 = vset.pattern.permute.xlu0 0
      %284 = vperm.xlu0 %283, %v273
      %v285 = vpop.permute.xlu0 %284
      %288 = vset.pattern.permute.xlu0 0
      %289 = vperm.xlu0 %288, %v274
      %v290 = vpop.permute.xlu0 %289
      %293 = vset.pattern.permute.xlu0 0
      %294 = vperm.xlu0 %293, %v275
      %v295 = vpop.permute.xlu0 %294
      %298 = vset.pattern.permute.xlu0 0
      %299 = vperm.xlu0 %298, %v276
      %v300 = vpop.permute.xlu0 %299
      %303 = vset.pattern.permute.xlu0 0
      %304 = vperm.xlu0 %303, %v277
      %v305 = vpop.permute.xlu0 %304
      %308 = vset.pattern.permute.xlu0 0
      %309 = vperm.xlu0 %308, %v278
      %v310 = vpop.permute.xlu0 %309
      %313 = vset.pattern.permute.xlu0 0
      %314 = vperm.xlu0 %313, %v279
      %v315 = vpop.permute.xlu0 %314
      %318 = vset.pattern.permute.xlu0 0
      %319 = vperm.xlu0 %318, %v280
      %v320 = vpop.permute.xlu0 %319
      %v323 = vlaneseq
      %v324 = vshrl.u32 %v323, 7
      %v325 = vsub.s32 0, %v324
      %v326 = vrot.slane %v281, %v325
      %v328 = vadd.f32 %v285, %v326
      %v329 = vadd.f32 %v290, %v326
      %v330 = vadd.f32 %v295, %v326
      %v331 = vadd.f32 %v300, %v326
      %v332 = vadd.f32 %v305, %v326
      %v333 = vadd.f32 %v310, %v326
      %v334 = vadd.f32 %v315, %v326
      %v335 = vadd.f32 %v320, %v326
      %v336 = vtanh.pop %v328
      %v337 = vtanh.pop %v329
      %v338 = vtanh.pop %v330
      %v339 = vtanh.pop %v331
      %v340 = vtanh.pop %v332
      %v341 = vtanh.pop %v333
      %v342 = vtanh.pop %v334
      %v343 = vtanh.pop %v335
      %v344 = vld [vmem:[%s258] sm:$0xf]
      %v345 = vld [vmem:[%s258 + $0x4] sm:$0xf]
      %v346 = vld [vmem:[%s258 + $0x8] sm:$0xf]
      %v347 = vld [vmem:[%s258 + $0xc] sm:$0xf]
      %v348 = vld [vmem:[%s258 + $0x10] sm:$0xf]
      %v349 = vld [vmem:[%s258 + $0x14] sm:$0xf]
      %v350 = vld [vmem:[%s258 + $0x18] sm:$0xf]
      %v351 = vld [vmem:[%s258 + $0x1c] sm:$0xf]
      %v352 = vunpack.c.l.bf16 %v344
      %v353 = vunpack.c.l.bf16 %v345
      %v354 = vunpack.c.l.bf16 %v346
      %v355 = vunpack.c.l.bf16 %v347
      %v356 = vunpack.c.l.bf16 %v348
      %v357 = vunpack.c.l.bf16 %v349
      %v358 = vunpack.c.l.bf16 %v350
      %v359 = vunpack.c.l.bf16 %v351
      %v360 = vmul.f32 %v336, %v352
      %v361 = vmul.f32 %v337, %v353
      %v362 = vmul.f32 %v338, %v354
      %v363 = vmul.f32 %v339, %v355
      %v364 = vmul.f32 %v340, %v356
      %v365 = vmul.f32 %v341, %v357
      %v366 = vmul.f32 %v342, %v358
      %v367 = vmul.f32 %v343, %v359
      %v368 = vpack.c.bf16 %v361, %v360
      %v369 = vpack.c.bf16 %v363, %v362
      %v370 = vpack.c.bf16 %v365, %v364
      %v371 = vpack.c.bf16 %v367, %v366
      %v372 = vld [vmem:[%s4] sm:$0xf]
      %v373 = vld [vmem:[%s4 + $0x4] sm:$0xf]
      %v374 = vld [vmem:[%s4 + $0x8] sm:$0xf]
      %v375 = vld [vmem:[%s4 + $0xc] sm:$0xf]
      %v376 = vld [vmem:[%s4 + $0x10] sm:$0xf]
      %v377 = vld [vmem:[%s4 + $0x14] sm:$0xf]
      %v378 = vld [vmem:[%s4 + $0x18] sm:$0xf]
      %v379 = vld [vmem:[%s4 + $0x1c] sm:$0xf]
      %v380 = vld [vmem:[%s4 + $0x20] sm:$0xf]
      %v381 = vld [vmem:[%s4 + $0x24] sm:$0xf]
      %v382 = vld [vmem:[%s4 + $0x28] sm:$0xf]
      %v383 = vld [vmem:[%s4 + $0x2c] sm:$0xf]
      %v384 = vld [vmem:[%s4 + $0x30] sm:$0xf]
      %v385 = vld [vmem:[%s4 + $0x34] sm:$0xf]
      %v386 = vld [vmem:[%s4 + $0x38] sm:$0xf]
      %v387 = vld [vmem:[%s4 + $0x3c] sm:$0xf]
      %v404 = vunpack.c.l.b16 %v372
      %v405 = vunpack.c.l.b16 %v373
      %v406 = vunpack.c.l.b16 %v374
      %v407 = vunpack.c.l.b16 %v375
      %v408 = vunpack.c.l.b16 %v376
      %v409 = vunpack.c.l.b16 %v377
      %v410 = vunpack.c.l.b16 %v378
      %v411 = vunpack.c.l.b16 %v379
      %v412 = vunpack.c.l.b16 %v380
      %v413 = vunpack.c.l.b16 %v381
      %v414 = vunpack.c.l.b16 %v382
      %v415 = vunpack.c.l.b16 %v383
      %v416 = vunpack.c.l.b16 %v384
      %v417 = vunpack.c.l.b16 %v385
      %v418 = vunpack.c.l.b16 %v386
      %v419 = vunpack.c.l.b16 %v387
      %v420 = vpack.c.b16 %v405, %v404
      %v421 = vpack.c.b16 %v407, %v406
      %v422 = vpack.c.b16 %v409, %v408
      %v423 = vpack.c.b16 %v411, %v410
      %v424 = vpack.c.b16 %v413, %v412
      %v425 = vpack.c.b16 %v415, %v414
      %v426 = vpack.c.b16 %v417, %v416
      %v427 = vpack.c.b16 %v419, %v418
      %436 = vmatprep.subr.bf16.mxu0 0
      %437 = vmatpush1.bf16.msra.mxu0 %v427
      %438 = vmatprep.subr.bf16.mxu0 0
      %439 = vmatpush1.bf16.msra.mxu0 %v426
      %440 = vmatprep.subr.bf16.mxu0 0
      %441 = vmatpush1.bf16.msra.mxu0 %v425
      %442 = vmatprep.subr.bf16.mxu0 0
      %443 = vmatpush1.bf16.msra.mxu0 %v424
      %444 = vmatprep.subr.bf16.mxu0 0
      %445 = vmatpush1.bf16.msra.mxu0 %v423
      %446 = vmatprep.subr.bf16.mxu0 0
      %447 = vmatpush1.bf16.msra.mxu0 %v422
      %448 = vmatprep.subr.bf16.mxu0 0
      %449 = vmatpush1.bf16.msra.mxu0 %v421
      %450 = vmatprep.subr.bf16.mxu0 0
      %451 = vmatpush1.bf16.msra.mxu0 %v420
      %452 = vmatprep.subr.bf16.mxu0 0
      %453 = vmatpush2.bf16.msra.mxu0 0
      %454 = vmatprep.subr.bf16.mxu0 0
      %455 = vmatpush2.bf16.msra.mxu0 0
      %456 = vmatprep.subr.bf16.mxu0 0
      %457 = vmatpush2.bf16.msra.mxu0 0
      %458 = vmatprep.subr.bf16.mxu0 0
      %459 = vmatpush2.bf16.msra.mxu0 0
      %460 = vmatprep.subr.bf16.mxu0 0
      %461 = vmatpush2.bf16.msra.mxu0 0
      %462 = vmatprep.subr.bf16.mxu0 0
      %463 = vmatpush2.bf16.msra.mxu0 0
      %464 = vmatprep.subr.bf16.mxu0 0
      %465 = vmatpush2.bf16.msra.mxu0 0
      %466 = vmatprep.subr.bf16.mxu0 0
      %467 = vmatpush2.bf16.msra.mxu0 0
      %468 = vmatprep.mubr.bf16.mxu0 0
      %469 = vmatmul.mubr.bf16.gmra.mxu0 %v368
      %v470 = vpop.f32.mrf.mxu0
      %v471 = vadd.f32 0.0, %v470
      %v472 = vpop.f32.mrf.mxu0
      %v473 = vpop.f32.mrf.mxu0
      %v474 = vadd.f32 0.0, %v473
      %v475 = vpop.f32.mrf.mxu0
      %476 = vmatprep.mubr.bf16.mxu0 0
      %477 = vmatmul.mubr.bf16.gmra.mxu0 %v369
      %v478 = vpop.f32.mrf.mxu0
      %v479 = vadd.f32 0.0, %v478
      %v480 = vpop.f32.mrf.mxu0
      %v481 = vpop.f32.mrf.mxu0
      %v482 = vadd.f32 0.0, %v481
      %v483 = vpop.f32.mrf.mxu0
      %484 = vmatprep.mubr.bf16.mxu0 0
      %485 = vmatmul.mubr.bf16.gmra.mxu0 %v370
      %v486 = vpop.f32.mrf.mxu0
      %v487 = vadd.f32 0.0, %v486
      %v488 = vpop.f32.mrf.mxu0
      %v489 = vpop.f32.mrf.mxu0
      %v490 = vadd.f32 0.0, %v489
      %v491 = vpop.f32.mrf.mxu0
      %492 = vmatprep.mubr.bf16.mxu0 0
      %493 = vmatmul.mubr.bf16.gmra.mxu0 %v371
      %v494 = vpop.f32.mrf.mxu0
      %v495 = vadd.f32 0.0, %v494
      %v496 = vpop.f32.mrf.mxu0
      %v497 = vpop.f32.mrf.mxu0
      %v498 = vadd.f32 0.0, %v497
      %v499 = vpop.f32.mrf.mxu0
      %500 = vdwg.mxu0
      %v501 = vld [vmem:[%s252] sm:$0xff]
      %v502 = vld [vmem:[%s252 + $0x8] sm:$0xff]
      %v503 = vld [vmem:[%s252 + $0x10] sm:$0xff]
      %v504 = vld [vmem:[%s252 + $0x18] sm:$0xff]
      %v505 = vld [vmem:[%s252 + $0x20] sm:$0xff]
      %v506 = vld [vmem:[%s252 + $0x28] sm:$0xff]
      %v507 = vld [vmem:[%s252 + $0x30] sm:$0xff]
      %v508 = vld [vmem:[%s252 + $0x38] sm:$0xff]
      %v509 = vmul.f32 %v501, 0.3
      %v510 = vmul.f32 %v502, 0.3
      %v511 = vmul.f32 %v503, 0.3
      %v512 = vmul.f32 %v504, 0.3
      %v513 = vmul.f32 %v505, 0.3
      %v514 = vmul.f32 %v506, 0.3
      %v515 = vmul.f32 %v507, 0.3
      %v516 = vmul.f32 %v508, 0.3
      %v517 = vadd.f32 %v509, %v471
      %v518 = vadd.f32 %v510, %v474
      %v519 = vadd.f32 %v511, %v479
      %v520 = vadd.f32 %v512, %v482
      %v521 = vadd.f32 %v513, %v487
      %v522 = vadd.f32 %v514, %v490
      %v523 = vadd.f32 %v515, %v495
      %v524 = vadd.f32 %v516, %v498
      %vm525 = vcmask 261120
      %526 = vst.msk [vmem:[%s270] sm:$0xff] %vm525, %v517
      %527 = vst.msk [vmem:[%s270 + $0x8] sm:$0xff] %vm525, %v518
      %528 = vst.msk [vmem:[%s270 + $0x10] sm:$0xff] %vm525, %v519
      %529 = vst.msk [vmem:[%s270 + $0x18] sm:$0xff] %vm525, %v520
      %530 = vst.msk [vmem:[%s270 + $0x20] sm:$0xff] %vm525, %v521
      %531 = vst.msk [vmem:[%s270 + $0x28] sm:$0xff] %vm525, %v522
      %532 = vst.msk [vmem:[%s270 + $0x30] sm:$0xff] %vm525, %v523
      %533 = vst.msk [vmem:[%s270 + $0x38] sm:$0xff] %vm525, %v524
      %s534 = smul.u32 8, %s16
      %p535 = scmp.lt.s32.totalorder %s534, 15
      %s536 = scalar_select %p535, %s534, 15
      %s537 = smul.addr %s536, 8
      %s538 = scalar_lea.vmem %s5, %s537
      // Predicated region
      $region41: #{fagcn_forward.5} parent=39 // pred_check
        %p539 = pneg %p154
      $region42: #{fagcn_forward.5} parent=39 // pred_check_branch
        %541 = sbr.rel (%p539) target = $region44
      $region43: #{fagcn_forward.5} parent=39 // pred_region
        %s542 = smul.u32 8, %s16
      $region44: #{fagcn_forward.5} parent=39 // pred_fallthru
        _
    $region40: #{fagcn_forward.5} parent=5 // pred_fallthru
      _
    %p543 = scmp.le.s32.totalorder 2, %s11
    // Predicated region
    $region45: #{fagcn_forward.5} parent=5 // pred_check
      %p544 = pneg %p543
    $region46: #{fagcn_forward.5} parent=5 // pred_check_branch
      %546 = sbr.rel (%p544) target = $region48
    $region47: #{fagcn_forward.5} parent=5 // pred_region
      %s547 = ssub.s32 %s11, 2
      // Predicated region
      $region49: #{fagcn_forward.5} parent=47 // pred_check
        %p548 = pneg %p160
      $region50: #{fagcn_forward.5} parent=47 // pred_check_branch
        %550 = sbr.rel (%p548) target = $region52
      $region51: #{fagcn_forward.5} parent=47 // pred_region
        %s551 = smul.u32 8, %s17
        %p552 = scmp.lt.s32.totalorder %s551, 15
        %s553 = scalar_select %p552, %s551, 15
        %s554 = smul.addr %s553, 8
        %s555 = scalar_lea.vmem %s5, %s554
      $region52: #{fagcn_forward.5} parent=47 // pred_fallthru
        _
    $region48: #{fagcn_forward.5} parent=5 // pred_fallthru
      _
  $region6: #{fagcn_forward.5} parent=0 // loop_footer
    %s15 = sadd.s32 1, %s11
  $region7: #{fagcn_forward.5} parent=0 // loop_footer_branch
    %10 = sbr.rel target = $region3
  $region8: #{fagcn_forward.5} parent=0 // loop_exit
    _

</llo_original>
